<compile_context>
chip_gen: v5e
topology: v5e:2x2
jax: 0.10.0
libtpu: 0.0.40
codegen_flags: <defaults>
</compile_context>

<pallas_src>
import functools
import math

import jax
import jax.numpy as jnp
from jax.experimental import pallas as pl
from jax.experimental.pallas import tpu as pltpu

LN_EPS = 1e-5  # torch.nn.LayerNorm default eps


# ----------------------------------------------------------------------------
# In-kernel helpers
# ----------------------------------------------------------------------------
def _layernorm(x, g, b):
    mu = jnp.mean(x, axis=-1, keepdims=True)
    xc = x - mu
    var = jnp.mean(xc * xc, axis=-1, keepdims=True)
    return xc * jax.lax.rsqrt(var + LN_EPS) * g + b


def _erf(z):
    # Abramowitz-Stegun 7.1.26 rational approximation (abs err ~1.5e-7); built only
    # from exp / reciprocal / mul / add / where so it lowers cleanly in Mosaic.
    a1, a2, a3, a4, a5 = 0.254829592, -0.284496736, 1.421413741, -1.453152027, 1.061405429
    p = 0.3275911
    az = jnp.abs(z)
    t = pl.reciprocal(1.0 + p * az, approx=False)
    poly = ((((a5 * t + a4) * t + a3) * t + a2) * t + a1) * t
    y = 1.0 - poly * jnp.exp(-az * az)
    return jnp.where(z >= 0.0, y, -y)


def _gelu_exact(x):
    # nn.GELU() default ('none' approximation): 0.5 * x * (1 + erf(x / sqrt(2)))
    return 0.5 * x * (1.0 + _erf(x * 0.7071067811865476))


# ----------------------------------------------------------------------------
# Fused transformer-stack kernel (all layers, whole batch, one grid step)
# ----------------------------------------------------------------------------
def _transformer_stack_kernel(
    x_ref, wqkv_ref, wo_ref, w1_ref, w2_ref, vecs_ref, b1_ref, o_ref,
    *, batch, seq, depth, heads, dim_head,
):
    """All `depth` pre-norm transformer layers on a (batch*seq, dim) activation.

    x_ref    : (batch*seq, dim)               activations (rows = (b, n))
    wqkv_ref : (depth, dim, 3*inner)          Q columns pre-scaled by dim_head**-0.5
    wo_ref   : (depth, heads, dim_head, dim)  per-head Wo blocks
    w1_ref   : (depth, dim, mlp_dim)
    w2_ref   : (depth, mlp_dim, dim)
    vecs_ref : (depth, 6, dim)                [ln1_g, ln1_b, ln2_g, ln2_b, b_out, b_ff2]
    b1_ref   : (depth, 1, mlp_dim)
    """
    inner = heads * dim_head
    x = x_ref[...]                                             # (B*N, D) f32

    for l in range(depth):                                     # static -> unrolled
        vecs = vecs_ref[l]                                     # (6, D)
        ln1_g, ln1_b = vecs[0:1], vecs[1:2]
        ln2_g, ln2_b = vecs[2:3], vecs[3:4]
        b_out, b_ff2 = vecs[4:5], vecs[5:6]
        w_qkv = wqkv_ref[l]                                    # (D, 3*inner)
        w_out = wo_ref[l]                                      # (heads, dh, D)
        w_ff1 = w1_ref[l]                                      # (D, mlp)
        w_ff2 = w2_ref[l]                                      # (mlp, D)
        b_ff1 = b1_ref[l]                                      # (1, mlp)

        # ---------------- Residual(PreNorm(Attention)) ----------------
        h = _layernorm(x, ln1_g, ln1_b)
        qkv = jnp.dot(h, w_qkv, preferred_element_type=jnp.float32)   # (B*N, 3*inner)

        # Stack per-(batch, head) slices on a new leading axis so q.kT and p.v are
        # single batched einsums over B*heads (scale already folded into Wq).
        q_parts, k_parts, v_parts = [], [], []
        for b in range(batch):
            rows = qkv[b * seq:(b + 1) * seq]                  # (N, 3*inner)
            for hh in range(heads):
                c0 = hh * dim_head
                q_parts.append(rows[:, c0:c0 + dim_head])
                k_parts.append(rows[:, inner + c0:inner + c0 + dim_head])
                v_parts.append(rows[:, 2 * inner + c0:2 * inner + c0 + dim_head])
        q = jnp.stack(q_parts, axis=0)                         # (B*H, N, dh)
        k = jnp.stack(k_parts, axis=0)
        v = jnp.stack(v_parts, axis=0)

        dots = jnp.einsum('bid,bjd->bij', q, k,
                          preferred_element_type=jnp.float32)  # (B*H, N, N)
        dots = dots - jnp.max(dots, axis=-1, keepdims=True)
        pr = jnp.exp(dots)
        pr = pr * pl.reciprocal(jnp.sum(pr, axis=-1, keepdims=True), approx=True)
        ctx = jnp.einsum('bij,bjd->bid', pr, v,
                         preferred_element_type=jnp.float32)   # (B*H, N, dh)

        # Output projection: one batched einsum against the per-head Wo blocks,
        # followed by a tiny sum over heads.  (A literal lane-concat of heads +
        # single 2-D matmul is avoided because sub-128-lane minor-dim concatenation
        # is not guaranteed to lower in Mosaic; this form is mathematically equal.)
        attn_rows = []
        for b in range(batch):
            ctx_b = ctx[b * heads:(b + 1) * heads]             # (H, N, dh)
            proj_b = jnp.einsum('hnd,hde->hne', ctx_b, w_out,
                                preferred_element_type=jnp.float32)  # (H, N, D)
            acc = proj_b[0]
            for hh in range(1, heads):
                acc = acc + proj_b[hh]
            attn_rows.append(acc)                              # (N, D)
        attn = jnp.concatenate(attn_rows, axis=0)              # (B*N, D) major concat
        x = x + attn + b_out

        # ---------------- Residual(PreNorm(FeedForward)) ----------------
        h2 = _layernorm(x, ln2_g, ln2_b)
        f = jnp.dot(h2, w_ff1, preferred_element_type=jnp.float32) + b_ff1
        f = _gelu_exact(f)
        f = jnp.dot(f, w_ff2, preferred_element_type=jnp.float32) + b_ff2
        x = x + f

    o_ref[...] = x


# ----------------------------------------------------------------------------
# Host-side parameter packing & the pallas_call wrapper
# ----------------------------------------------------------------------------
def pack_transformer_params(layers, *, heads, dim_head):
    """Stack per-layer weights along a leading `depth` axis, fold the softmax scale
    into the Q columns of Wqkv (to_qkv has no bias, so this is exact), reshape Wo
    into per-head blocks, and pack the six (dim,) vectors of each layer into one
    slab so the kernel sees 7 DMA'd inputs in total."""
    dim = layers[0]["wqkv"].shape[0]
    inner = heads * dim_head
    scale = dim_head ** (-0.5)

    wqkv = jnp.stack([l["wqkv"] for l in layers], axis=0)            # (depth, D, 3*inner)
    wqkv = wqkv.at[:, :, :inner].multiply(scale)
    wo = jnp.stack([l["wo"].reshape(heads, dim_head, dim) for l in layers], axis=0)
    w1 = jnp.stack([l["w1"] for l in layers], axis=0)
    w2 = jnp.stack([l["w2"] for l in layers], axis=0)
    vecs = jnp.stack(
        [jnp.stack([l["ln1_g"], l["ln1_b"], l["ln2_g"], l["ln2_b"], l["bo"], l["b2"]],
                   axis=0) for l in layers], axis=0)                 # (depth, 6, D)
    b1 = jnp.stack([l["b1"] for l in layers], axis=0)[:, None, :]    # (depth, 1, mlp)
    return wqkv, wo, w1, w2, vecs, b1


def transformer_forward(x, layers, *, heads, dim_head):
    """Pallas forward of Transformer(dim, depth, heads, dim_head, mlp_dim) in eval
    mode (mask=None, dropout=0).  x: (B, N, dim) float32 -> (B, N, dim)."""
    # TODO(synk): the optional attention-mask argument of the reference forward is
    # not implemented (the module is exercised with mask=None).
    B, N, D = x.shape
    depth = len(layers)
    wqkv, wo, w1, w2, vecs, b1 = pack_transformer_params(
        layers, heads=heads, dim_head=dim_head)

    kernel = functools.partial(
        _transformer_stack_kernel,
        batch=B, seq=N, depth=depth, heads=heads, dim_head=dim_head)

    vmem = pl.BlockSpec(memory_space=pltpu.MemorySpace.VMEM)
    # One fused kernel, no grid: activations ((B*N, D) f32) and every layer's weights
    # (a few tens of KB here) are VMEM-resident for the whole call, so there are no
    # per-layer launches or HBM round trips.
    # TODO(synk): if B*N / dim grow, switch to row-tiled BlockSpecs (+ vmem_limit_bytes)
    # and 128-lane padded weights; whole-array VMEM residency only holds at small
    # shapes (v7x has 64 MiB physical VMEM vs 128 MiB on v5e/v6e).
    out2d = pl.pallas_call(
        kernel,
        in_specs=[vmem] * 7,
        out_specs=vmem,
        out_shape=jax.ShapeDtypeStruct((B * N, D), jnp.float32),
    )(x.reshape(B * N, D), wqkv, wo, w1, w2, vecs, b1)
    return out2d.reshape(B, N, D)


# ----------------------------------------------------------------------------
# Deterministic synthetic parameters (mirrors the torch module's structure)
# ----------------------------------------------------------------------------
def init_transformer_params(key, *, dim, depth, heads, dim_head, mlp_dim):
    inner = heads * dim_head
    project_out = not (heads == 1 and dim_head == dim)
    keys = iter(jax.random.split(key, 11 * depth))

    def nrm(shape, scale):
        return jax.random.normal(next(keys), shape, jnp.float32) * scale

    layers = []
    for _ in range(depth):
        ln1_g = 1.0 + nrm((dim,), 0.1)
        ln1_b = nrm((dim,), 0.1)
        wqkv = nrm((dim, 3 * inner), 1.0 / math.sqrt(dim))
        wo = nrm((inner, dim), 1.0 / math.sqrt(inner))
        bo = nrm((dim,), 0.02)
        ln2_g = 1.0 + nrm((dim,), 0.1)
        ln2_b = nrm((dim,), 0.1)
        w1 = nrm((dim, mlp_dim), 1.0 / math.sqrt(dim))
        b1 = nrm((mlp_dim,), 0.02)
        w2 = nrm((mlp_dim, dim), 1.0 / math.sqrt(mlp_dim))
        b2 = nrm((dim,), 0.02)
        if not project_out:  # torch uses nn.Identity() for to_out in this case
            wo = jnp.eye(dim, dtype=jnp.float32)
            bo = jnp.zeros((dim,), jnp.float32)
        layers.append(dict(ln1_g=ln1_g, ln1_b=ln1_b, wqkv=wqkv, wo=wo, bo=bo,
                           ln2_g=ln2_g, ln2_b=ln2_b, w1=w1, b1=b1, w2=w2, b2=b2))
    return layers


# ----------------------------------------------------------------------------
# Pure-JAX reference (mirrors the PyTorch module exactly, exact softmax / erf-GELU)
# ----------------------------------------------------------------------------
def transformer_reference(x, layers, *, heads, dim_head):
    B, N, D = x.shape
    inner = heads * dim_head
    scale = dim_head ** (-0.5)

    def ln(v, g, b):
        mu = v.mean(-1, keepdims=True)
        var = ((v - mu) ** 2).mean(-1, keepdims=True)
        return (v - mu) / jnp.sqrt(var + LN_EPS) * g + b

    for p in layers:
        h = ln(x, p["ln1_g"], p["ln1_b"])
        qkv = h @ p["wqkv"]
        q, k, v = jnp.split(qkv, 3, axis=-1)
        split_heads = lambda t: t.reshape(B, N, heads, dim_head).transpose(0, 2, 1, 3)
        q, k, v = split_heads(q), split_heads(k), split_heads(v)
        dots = jnp.einsum('bhid,bhjd->bhij', q, k) * scale
        attn = jax.nn.softmax(dots, axis=-1)
        ctx = jnp.einsum('bhij,bhjd->bhid', attn, v)
        ctx = ctx.transpose(0, 2, 1, 3).reshape(B, N, inner)
        x = x + ctx @ p["wo"] + p["bo"]
        h2 = ln(x, p["ln2_g"], p["ln2_b"])
        f = jax.nn.gelu(h2 @ p["w1"] + p["b1"], approximate=False)
        x = x + f @ p["w2"] + p["b2"]
    return x


# ----------------------------------------------------------------------------
if __name__ == "__main__":
    # Small shapes consistent with the module: x = [batch, seq, dim]
    B, N = 2, 8
    dim, depth, heads, dim_head, mlp_dim = 32, 2, 2, 16, 64

    key = jax.random.PRNGKey(0)
    k_par, k_in = jax.random.split(key)
    layers = init_transformer_params(
        k_par, dim=dim, depth=depth, heads=heads, dim_head=dim_head, mlp_dim=mlp_dim)
    x = jax.random.normal(k_in, (B, N, dim), jnp.float32)

    out = transformer_forward(x, layers, heads=heads, dim_head=dim_head)
    out = jax.block_until_ready(out)

    ref = transformer_reference(x, layers, heads=heads, dim_head=dim_head)
    err = float(jnp.max(jnp.abs(out - ref)))

    assert out.shape == (B, N, dim)
    assert bool(jnp.all(jnp.isfinite(out)))
    # Loose tolerance: the kernel uses pl.reciprocal(approx=True) for the softmax
    # denominator and an erf rational approximation inside GELU.
    assert err < 5e-2, f"max abs error vs reference: {err}"
    print("KERNEL_OK")
</pallas_src>

<mosaic_0001>
module attributes {stable_mosaic.version = 11 : i64} {
  func.func @_transformer_stack_kernel(%arg0: memref<16x32xf32, #tpu.memory_space<vmem>>, %arg1: memref<2x32x96xf32, #tpu.memory_space<vmem>>, %arg2: memref<2x2x16x32xf32, #tpu.memory_space<vmem>>, %arg3: memref<2x32x64xf32, #tpu.memory_space<vmem>>, %arg4: memref<2x64x32xf32, #tpu.memory_space<vmem>>, %arg5: memref<2x6x32xf32, #tpu.memory_space<vmem>>, %arg6: memref<2x1x64xf32, #tpu.memory_space<vmem>>, %arg7: memref<16x32xf32, #tpu.memory_space<vmem>>) attributes {dimension_semantics = [], scalar_prefetch = 0 : i64, scratch_operands = 0 : i64, tpu.core_type = #tpu.core_type<tc>} {
    %c0 = arith.constant 0 : index
    %c0_0 = arith.constant 0 : index
    %0 = vector.load %arg0[%c0, %c0_0] : memref<16x32xf32, #tpu.memory_space<vmem>>, vector<16x32xf32>
    %c0_1 = arith.constant 0 : index
    %c0_2 = arith.constant 0 : index
    %c0_3 = arith.constant 0 : index
    %1 = vector.load %arg5[%c0_1, %c0_2, %c0_3] : memref<2x6x32xf32, #tpu.memory_space<vmem>>, vector<1x6x32xf32>
    %2 = vector.shape_cast %1 : vector<1x6x32xf32> to vector<6x32xf32>
    %3 = vector.extract_strided_slice %2 {offsets = [0, 0], sizes = [1, 32], strides = [1, 1]} : vector<6x32xf32> to vector<1x32xf32>
    %4 = vector.extract_strided_slice %2 {offsets = [1, 0], sizes = [1, 32], strides = [1, 1]} : vector<6x32xf32> to vector<1x32xf32>
    %5 = vector.extract_strided_slice %2 {offsets = [2, 0], sizes = [1, 32], strides = [1, 1]} : vector<6x32xf32> to vector<1x32xf32>
    %6 = vector.extract_strided_slice %2 {offsets = [3, 0], sizes = [1, 32], strides = [1, 1]} : vector<6x32xf32> to vector<1x32xf32>
    %7 = vector.extract_strided_slice %2 {offsets = [4, 0], sizes = [1, 32], strides = [1, 1]} : vector<6x32xf32> to vector<1x32xf32>
    %8 = vector.extract_strided_slice %2 {offsets = [5, 0], sizes = [1, 32], strides = [1, 1]} : vector<6x32xf32> to vector<1x32xf32>
    %c0_4 = arith.constant 0 : index
    %c0_5 = arith.constant 0 : index
    %c0_6 = arith.constant 0 : index
    %9 = vector.load %arg1[%c0_4, %c0_5, %c0_6] : memref<2x32x96xf32, #tpu.memory_space<vmem>>, vector<1x32x96xf32>
    %10 = vector.shape_cast %9 : vector<1x32x96xf32> to vector<32x96xf32>
    %c0_7 = arith.constant 0 : index
    %c0_8 = arith.constant 0 : index
    %c0_9 = arith.constant 0 : index
    %c0_10 = arith.constant 0 : index
    %11 = vector.load %arg2[%c0_7, %c0_8, %c0_9, %c0_10] : memref<2x2x16x32xf32, #tpu.memory_space<vmem>>, vector<1x2x16x32xf32>
    %12 = vector.shape_cast %11 : vector<1x2x16x32xf32> to vector<2x16x32xf32>
    %c0_11 = arith.constant 0 : index
    %c0_12 = arith.constant 0 : index
    %c0_13 = arith.constant 0 : index
    %13 = vector.load %arg3[%c0_11, %c0_12, %c0_13] : memref<2x32x64xf32, #tpu.memory_space<vmem>>, vector<1x32x64xf32>
    %14 = vector.shape_cast %13 : vector<1x32x64xf32> to vector<32x64xf32>
    %c0_14 = arith.constant 0 : index
    %c0_15 = arith.constant 0 : index
    %c0_16 = arith.constant 0 : index
    %15 = vector.load %arg4[%c0_14, %c0_15, %c0_16] : memref<2x64x32xf32, #tpu.memory_space<vmem>>, vector<1x64x32xf32>
    %16 = vector.shape_cast %15 : vector<1x64x32xf32> to vector<64x32xf32>
    %c0_17 = arith.constant 0 : index
    %c0_18 = arith.constant 0 : index
    %c0_19 = arith.constant 0 : index
    %17 = vector.load %arg6[%c0_17, %c0_18, %c0_19] : memref<2x1x64xf32, #tpu.memory_space<vmem>>, vector<1x1x64xf32>
    %18 = vector.shape_cast %17 : vector<1x1x64xf32> to vector<1x64xf32>
    %cst = arith.constant dense<0.000000e+00> : vector<16xf32>
    %19 = vector.multi_reduction <add>, %0, %cst [1] : vector<16x32xf32> to vector<16xf32>
    %20 = vector.shape_cast %19 : vector<16xf32> to vector<16x1xf32>
    %cst_20 = arith.constant 3.200000e+01 : f32
    %21 = vector.broadcast %cst_20 : f32 to vector<16x1xf32>
    %22 = arith.divf %20, %21 : vector<16x1xf32>
    %23 = vector.broadcast %22 : vector<16x1xf32> to vector<16x32xf32>
    %24 = arith.subf %0, %23 : vector<16x32xf32>
    %25 = arith.mulf %24, %24 : vector<16x32xf32>
    %cst_21 = arith.constant dense<0.000000e+00> : vector<16xf32>
    %26 = vector.multi_reduction <add>, %25, %cst_21 [1] : vector<16x32xf32> to vector<16xf32>
    %27 = vector.shape_cast %26 : vector<16xf32> to vector<16x1xf32>
    %cst_22 = arith.constant 3.200000e+01 : f32
    %28 = vector.broadcast %cst_22 : f32 to vector<16x1xf32>
    %29 = arith.divf %27, %28 : vector<16x1xf32>
    %cst_23 = arith.constant 9.99999974E-6 : f32
    %30 = vector.broadcast %cst_23 : f32 to vector<16x1xf32>
    %31 = arith.addf %29, %30 : vector<16x1xf32>
    %32 = math.rsqrt %31 : vector<16x1xf32>
    %33 = vector.broadcast %32 : vector<16x1xf32> to vector<16x32xf32>
    %34 = arith.mulf %24, %33 : vector<16x32xf32>
    %35 = vector.broadcast %3 : vector<1x32xf32> to vector<16x32xf32>
    %36 = arith.mulf %34, %35 : vector<16x32xf32>
    %37 = vector.broadcast %4 : vector<1x32xf32> to vector<16x32xf32>
    %38 = arith.addf %36, %37 : vector<16x32xf32>
    %cst_24 = arith.constant dense<0.000000e+00> : vector<16x96xf32>
    %39 = tpu.matmul %38, %10, %cst_24 {dimension_numbers = #tpu.dot_dimension_numbers<[1], [0], [0], [1], [0, 0, 1, 1], [], []>} : vector<16x32xf32>, vector<32x96xf32>, vector<16x96xf32> -> vector<16x96xf32>
    %40 = vector.extract_strided_slice %39 {offsets = [0, 0], sizes = [8, 96], strides = [1, 1]} : vector<16x96xf32> to vector<8x96xf32>
    %41 = vector.extract_strided_slice %40 {offsets = [0, 0], sizes = [8, 16], strides = [1, 1]} : vector<8x96xf32> to vector<8x16xf32>
    %42 = vector.extract_strided_slice %40 {offsets = [0, 32], sizes = [8, 16], strides = [1, 1]} : vector<8x96xf32> to vector<8x16xf32>
    %43 = vector.extract_strided_slice %40 {offsets = [0, 64], sizes = [8, 16], strides = [1, 1]} : vector<8x96xf32> to vector<8x16xf32>
    %44 = vector.extract_strided_slice %40 {offsets = [0, 16], sizes = [8, 16], strides = [1, 1]} : vector<8x96xf32> to vector<8x16xf32>
    %45 = vector.extract_strided_slice %40 {offsets = [0, 48], sizes = [8, 16], strides = [1, 1]} : vector<8x96xf32> to vector<8x16xf32>
    %46 = vector.extract_strided_slice %40 {offsets = [0, 80], sizes = [8, 16], strides = [1, 1]} : vector<8x96xf32> to vector<8x16xf32>
    %47 = vector.extract_strided_slice %39 {offsets = [8, 0], sizes = [8, 96], strides = [1, 1]} : vector<16x96xf32> to vector<8x96xf32>
    %48 = vector.extract_strided_slice %47 {offsets = [0, 0], sizes = [8, 16], strides = [1, 1]} : vector<8x96xf32> to vector<8x16xf32>
    %49 = vector.extract_strided_slice %47 {offsets = [0, 32], sizes = [8, 16], strides = [1, 1]} : vector<8x96xf32> to vector<8x16xf32>
    %50 = vector.extract_strided_slice %47 {offsets = [0, 64], sizes = [8, 16], strides = [1, 1]} : vector<8x96xf32> to vector<8x16xf32>
    %51 = vector.extract_strided_slice %47 {offsets = [0, 16], sizes = [8, 16], strides = [1, 1]} : vector<8x96xf32> to vector<8x16xf32>
    %52 = vector.extract_strided_slice %47 {offsets = [0, 48], sizes = [8, 16], strides = [1, 1]} : vector<8x96xf32> to vector<8x16xf32>
    %53 = vector.extract_strided_slice %47 {offsets = [0, 80], sizes = [8, 16], strides = [1, 1]} : vector<8x96xf32> to vector<8x16xf32>
    %54 = vector.shape_cast %41 : vector<8x16xf32> to vector<1x8x16xf32>
    %55 = vector.shape_cast %44 : vector<8x16xf32> to vector<1x8x16xf32>
    %56 = vector.shape_cast %48 : vector<8x16xf32> to vector<1x8x16xf32>
    %57 = vector.shape_cast %51 : vector<8x16xf32> to vector<1x8x16xf32>
    %58 = tpu.concatenate %54, %55, %56, %57 in 0 : vector<1x8x16xf32>, vector<1x8x16xf32>, vector<1x8x16xf32>, vector<1x8x16xf32> -> vector<4x8x16xf32>
    %59 = vector.shape_cast %42 : vector<8x16xf32> to vector<1x8x16xf32>
    %60 = vector.shape_cast %45 : vector<8x16xf32> to vector<1x8x16xf32>
    %61 = vector.shape_cast %49 : vector<8x16xf32> to vector<1x8x16xf32>
    %62 = vector.shape_cast %52 : vector<8x16xf32> to vector<1x8x16xf32>
    %63 = tpu.concatenate %59, %60, %61, %62 in 0 : vector<1x8x16xf32>, vector<1x8x16xf32>, vector<1x8x16xf32>, vector<1x8x16xf32> -> vector<4x8x16xf32>
    %64 = vector.shape_cast %43 : vector<8x16xf32> to vector<1x8x16xf32>
    %65 = vector.shape_cast %46 : vector<8x16xf32> to vector<1x8x16xf32>
    %66 = vector.shape_cast %50 : vector<8x16xf32> to vector<1x8x16xf32>
    %67 = vector.shape_cast %53 : vector<8x16xf32> to vector<1x8x16xf32>
    %68 = tpu.concatenate %64, %65, %66, %67 in 0 : vector<1x8x16xf32>, vector<1x8x16xf32>, vector<1x8x16xf32>, vector<1x8x16xf32> -> vector<4x8x16xf32>
    "tpu.trace_start"() <{level = 10 : i32, message = "bid,bjd->bij"}> : () -> ()
    %cst_25 = arith.constant dense<0.000000e+00> : vector<4x8x8xf32>
    %69 = tpu.matmul %58, %63, %cst_25 {dimension_numbers = #tpu.dot_dimension_numbers<[2], [2], [1], [1], [0, 0, 0, 1, 1, 1], [0], [0]>} : vector<4x8x16xf32>, vector<4x8x16xf32>, vector<4x8x8xf32> -> vector<4x8x8xf32>
    "tpu.trace_stop"() : () -> ()
    %cst_26 = arith.constant dense<0xFF800000> : vector<4x8xf32>
    %70 = vector.multi_reduction <maximumf>, %69, %cst_26 [2] : vector<4x8x8xf32> to vector<4x8xf32>
    %71 = vector.shape_cast %70 : vector<4x8xf32> to vector<4x8x1xf32>
    %72 = vector.broadcast %71 : vector<4x8x1xf32> to vector<4x8x8xf32>
    %73 = arith.subf %69, %72 : vector<4x8x8xf32>
    %74 = math.exp %73 : vector<4x8x8xf32>
    %cst_27 = arith.constant dense<0.000000e+00> : vector<4x8xf32>
    %75 = vector.multi_reduction <add>, %74, %cst_27 [2] : vector<4x8x8xf32> to vector<4x8xf32>
    %76 = vector.shape_cast %75 : vector<4x8xf32> to vector<4x8x1xf32>
    %77 = tpu.reciprocal %76 {approx = true} : vector<4x8x1xf32> -> vector<4x8x1xf32>
    %78 = vector.broadcast %77 : vector<4x8x1xf32> to vector<4x8x8xf32>
    %79 = arith.mulf %74, %78 : vector<4x8x8xf32>
    "tpu.trace_start"() <{level = 10 : i32, message = "bij,bjd->bid"}> : () -> ()
    %cst_28 = arith.constant dense<0.000000e+00> : vector<4x8x16xf32>
    %80 = tpu.matmul %79, %68, %cst_28 {dimension_numbers = #tpu.dot_dimension_numbers<[2], [1], [1], [2], [0, 0, 0, 1, 1, 2], [0], [0]>} : vector<4x8x8xf32>, vector<4x8x16xf32>, vector<4x8x16xf32> -> vector<4x8x16xf32>
    "tpu.trace_stop"() : () -> ()
    %81 = vector.extract_strided_slice %80 {offsets = [0, 0, 0], sizes = [2, 8, 16], strides = [1, 1, 1]} : vector<4x8x16xf32> to vector<2x8x16xf32>
    "tpu.trace_start"() <{level = 10 : i32, message = "hnd,hde->hne"}> : () -> ()
    %cst_29 = arith.constant dense<0.000000e+00> : vector<2x8x32xf32>
    %82 = tpu.matmul %81, %12, %cst_29 {dimension_numbers = #tpu.dot_dimension_numbers<[2], [1], [1], [2], [0, 0, 0, 1, 1, 2], [0], [0]>} : vector<2x8x16xf32>, vector<2x16x32xf32>, vector<2x8x32xf32> -> vector<2x8x32xf32>
    "tpu.trace_stop"() : () -> ()
    %83 = vector.extract_strided_slice %82 {offsets = [0, 0, 0], sizes = [1, 8, 32], strides = [1, 1, 1]} : vector<2x8x32xf32> to vector<1x8x32xf32>
    %84 = vector.shape_cast %83 : vector<1x8x32xf32> to vector<8x32xf32>
    %85 = vector.extract_strided_slice %82 {offsets = [1, 0, 0], sizes = [1, 8, 32], strides = [1, 1, 1]} : vector<2x8x32xf32> to vector<1x8x32xf32>
    %86 = vector.shape_cast %85 : vector<1x8x32xf32> to vector<8x32xf32>
    %87 = arith.addf %84, %86 : vector<8x32xf32>
    %88 = vector.extract_strided_slice %80 {offsets = [2, 0, 0], sizes = [2, 8, 16], strides = [1, 1, 1]} : vector<4x8x16xf32> to vector<2x8x16xf32>
    "tpu.trace_start"() <{level = 10 : i32, message = "hnd,hde->hne"}> : () -> ()
    %cst_30 = arith.constant dense<0.000000e+00> : vector<2x8x32xf32>
    %89 = tpu.matmul %88, %12, %cst_30 {dimension_numbers = #tpu.dot_dimension_numbers<[2], [1], [1], [2], [0, 0, 0, 1, 1, 2], [0], [0]>} : vector<2x8x16xf32>, vector<2x16x32xf32>, vector<2x8x32xf32> -> vector<2x8x32xf32>
    "tpu.trace_stop"() : () -> ()
    %90 = vector.extract_strided_slice %89 {offsets = [0, 0, 0], sizes = [1, 8, 32], strides = [1, 1, 1]} : vector<2x8x32xf32> to vector<1x8x32xf32>
    %91 = vector.shape_cast %90 : vector<1x8x32xf32> to vector<8x32xf32>
    %92 = vector.extract_strided_slice %89 {offsets = [1, 0, 0], sizes = [1, 8, 32], strides = [1, 1, 1]} : vector<2x8x32xf32> to vector<1x8x32xf32>
    %93 = vector.shape_cast %92 : vector<1x8x32xf32> to vector<8x32xf32>
    %94 = arith.addf %91, %93 : vector<8x32xf32>
    %95 = tpu.concatenate %87, %94 in 0 : vector<8x32xf32>, vector<8x32xf32> -> vector<16x32xf32>
    %96 = arith.addf %0, %95 : vector<16x32xf32>
    %97 = vector.broadcast %7 : vector<1x32xf32> to vector<16x32xf32>
    %98 = arith.addf %96, %97 : vector<16x32xf32>
    %cst_31 = arith.constant dense<0.000000e+00> : vector<16xf32>
    %99 = vector.multi_reduction <add>, %98, %cst_31 [1] : vector<16x32xf32> to vector<16xf32>
    %100 = vector.shape_cast %99 : vector<16xf32> to vector<16x1xf32>
    %cst_32 = arith.constant 3.200000e+01 : f32
    %101 = vector.broadcast %cst_32 : f32 to vector<16x1xf32>
    %102 = arith.divf %100, %101 : vector<16x1xf32>
    %103 = vector.broadcast %102 : vector<16x1xf32> to vector<16x32xf32>
    %104 = arith.subf %98, %103 : vector<16x32xf32>
    %105 = arith.mulf %104, %104 : vector<16x32xf32>
    %cst_33 = arith.constant dense<0.000000e+00> : vector<16xf32>
    %106 = vector.multi_reduction <add>, %105, %cst_33 [1] : vector<16x32xf32> to vector<16xf32>
    %107 = vector.shape_cast %106 : vector<16xf32> to vector<16x1xf32>
    %cst_34 = arith.constant 3.200000e+01 : f32
    %108 = vector.broadcast %cst_34 : f32 to vector<16x1xf32>
    %109 = arith.divf %107, %108 : vector<16x1xf32>
    %cst_35 = arith.constant 9.99999974E-6 : f32
    %110 = vector.broadcast %cst_35 : f32 to vector<16x1xf32>
    %111 = arith.addf %109, %110 : vector<16x1xf32>
    %112 = math.rsqrt %111 : vector<16x1xf32>
    %113 = vector.broadcast %112 : vector<16x1xf32> to vector<16x32xf32>
    %114 = arith.mulf %104, %113 : vector<16x32xf32>
    %115 = vector.broadcast %5 : vector<1x32xf32> to vector<16x32xf32>
    %116 = arith.mulf %114, %115 : vector<16x32xf32>
    %117 = vector.broadcast %6 : vector<1x32xf32> to vector<16x32xf32>
    %118 = arith.addf %116, %117 : vector<16x32xf32>
    %cst_36 = arith.constant dense<0.000000e+00> : vector<16x64xf32>
    %119 = tpu.matmul %118, %14, %cst_36 {dimension_numbers = #tpu.dot_dimension_numbers<[1], [0], [0], [1], [0, 0, 1, 1], [], []>} : vector<16x32xf32>, vector<32x64xf32>, vector<16x64xf32> -> vector<16x64xf32>
    %120 = vector.broadcast %18 : vector<1x64xf32> to vector<16x64xf32>
    %121 = arith.addf %119, %120 : vector<16x64xf32>
    %cst_37 = arith.constant 5.000000e-01 : f32
    %122 = vector.broadcast %cst_37 : f32 to vector<16x64xf32>
    %123 = arith.mulf %122, %121 : vector<16x64xf32>
    %cst_38 = arith.constant 0.707106769 : f32
    %124 = vector.broadcast %cst_38 : f32 to vector<16x64xf32>
    %125 = arith.mulf %121, %124 : vector<16x64xf32>
    %126 = math.absf %125 : vector<16x64xf32>
    %cst_39 = arith.constant 0.327591091 : f32
    %127 = vector.broadcast %cst_39 : f32 to vector<16x64xf32>
    %128 = arith.mulf %127, %126 : vector<16x64xf32>
    %cst_40 = arith.constant 1.000000e+00 : f32
    %129 = vector.broadcast %cst_40 : f32 to vector<16x64xf32>
    %130 = arith.addf %129, %128 : vector<16x64xf32>
    %131 = tpu.reciprocal %130 : vector<16x64xf32> -> vector<16x64xf32>
    %cst_41 = arith.constant 1.06140542 : f32
    %132 = vector.broadcast %cst_41 : f32 to vector<16x64xf32>
    %133 = arith.mulf %132, %131 : vector<16x64xf32>
    %cst_42 = arith.constant -1.45315206 : f32
    %134 = vector.broadcast %cst_42 : f32 to vector<16x64xf32>
    %135 = arith.addf %133, %134 : vector<16x64xf32>
    %136 = arith.mulf %135, %131 : vector<16x64xf32>
    %cst_43 = arith.constant 1.42141378 : f32
    %137 = vector.broadcast %cst_43 : f32 to vector<16x64xf32>
    %138 = arith.addf %136, %137 : vector<16x64xf32>
    %139 = arith.mulf %138, %131 : vector<16x64xf32>
    %cst_44 = arith.constant -0.284496725 : f32
    %140 = vector.broadcast %cst_44 : f32 to vector<16x64xf32>
    %141 = arith.addf %139, %140 : vector<16x64xf32>
    %142 = arith.mulf %141, %131 : vector<16x64xf32>
    %cst_45 = arith.constant 0.254829586 : f32
    %143 = vector.broadcast %cst_45 : f32 to vector<16x64xf32>
    %144 = arith.addf %142, %143 : vector<16x64xf32>
    %145 = arith.mulf %144, %131 : vector<16x64xf32>
    %cst_46 = arith.constant 0.000000e+00 : f32
    %146 = vector.broadcast %cst_46 : f32 to vector<16x64xf32>
    %147 = arith.subf %146, %126 : vector<16x64xf32>
    %148 = arith.mulf %147, %126 : vector<16x64xf32>
    %149 = math.exp %148 : vector<16x64xf32>
    %150 = arith.mulf %145, %149 : vector<16x64xf32>
    %cst_47 = arith.constant 1.000000e+00 : f32
    %151 = vector.broadcast %cst_47 : f32 to vector<16x64xf32>
    %152 = arith.subf %151, %150 : vector<16x64xf32>
    %cst_48 = arith.constant 0.000000e+00 : f32
    %153 = vector.broadcast %cst_48 : f32 to vector<16x64xf32>
    %154 = arith.cmpf oge, %125, %153 : vector<16x64xf32>
    %cst_49 = arith.constant 0.000000e+00 : f32
    %155 = vector.broadcast %cst_49 : f32 to vector<16x64xf32>
    %156 = arith.subf %155, %152 : vector<16x64xf32>
    %157 = arith.select %154, %152, %156 : vector<16x64xi1>, vector<16x64xf32>
    %cst_50 = arith.constant 1.000000e+00 : f32
    %158 = vector.broadcast %cst_50 : f32 to vector<16x64xf32>
    %159 = arith.addf %158, %157 : vector<16x64xf32>
    %160 = arith.mulf %123, %159 : vector<16x64xf32>
    %cst_51 = arith.constant dense<0.000000e+00> : vector<16x32xf32>
    %161 = tpu.matmul %160, %16, %cst_51 {dimension_numbers = #tpu.dot_dimension_numbers<[1], [0], [0], [1], [0, 0, 1, 1], [], []>} : vector<16x64xf32>, vector<64x32xf32>, vector<16x32xf32> -> vector<16x32xf32>
    %162 = vector.broadcast %8 : vector<1x32xf32> to vector<16x32xf32>
    %163 = arith.addf %161, %162 : vector<16x32xf32>
    %164 = arith.addf %98, %163 : vector<16x32xf32>
    %c1 = arith.constant 1 : index
    %c0_52 = arith.constant 0 : index
    %c0_53 = arith.constant 0 : index
    %165 = vector.load %arg5[%c1, %c0_52, %c0_53] : memref<2x6x32xf32, #tpu.memory_space<vmem>>, vector<1x6x32xf32>
    %166 = vector.shape_cast %165 : vector<1x6x32xf32> to vector<6x32xf32>
    %167 = vector.extract_strided_slice %166 {offsets = [0, 0], sizes = [1, 32], strides = [1, 1]} : vector<6x32xf32> to vector<1x32xf32>
    %168 = vector.extract_strided_slice %166 {offsets = [1, 0], sizes = [1, 32], strides = [1, 1]} : vector<6x32xf32> to vector<1x32xf32>
    %169 = vector.extract_strided_slice %166 {offsets = [2, 0], sizes = [1, 32], strides = [1, 1]} : vector<6x32xf32> to vector<1x32xf32>
    %170 = vector.extract_strided_slice %166 {offsets = [3, 0], sizes = [1, 32], strides = [1, 1]} : vector<6x32xf32> to vector<1x32xf32>
    %171 = vector.extract_strided_slice %166 {offsets = [4, 0], sizes = [1, 32], strides = [1, 1]} : vector<6x32xf32> to vector<1x32xf32>
    %172 = vector.extract_strided_slice %166 {offsets = [5, 0], sizes = [1, 32], strides = [1, 1]} : vector<6x32xf32> to vector<1x32xf32>
    %c1_54 = arith.constant 1 : index
    %c0_55 = arith.constant 0 : index
    %c0_56 = arith.constant 0 : index
    %173 = vector.load %arg1[%c1_54, %c0_55, %c0_56] : memref<2x32x96xf32, #tpu.memory_space<vmem>>, vector<1x32x96xf32>
    %174 = vector.shape_cast %173 : vector<1x32x96xf32> to vector<32x96xf32>
    %c1_57 = arith.constant 1 : index
    %c0_58 = arith.constant 0 : index
    %c0_59 = arith.constant 0 : index
    %c0_60 = arith.constant 0 : index
    %175 = vector.load %arg2[%c1_57, %c0_58, %c0_59, %c0_60] : memref<2x2x16x32xf32, #tpu.memory_space<vmem>>, vector<1x2x16x32xf32>
    %176 = vector.shape_cast %175 : vector<1x2x16x32xf32> to vector<2x16x32xf32>
    %c1_61 = arith.constant 1 : index
    %c0_62 = arith.constant 0 : index
    %c0_63 = arith.constant 0 : index
    %177 = vector.load %arg3[%c1_61, %c0_62, %c0_63] : memref<2x32x64xf32, #tpu.memory_space<vmem>>, vector<1x32x64xf32>
    %178 = vector.shape_cast %177 : vector<1x32x64xf32> to vector<32x64xf32>
    %c1_64 = arith.constant 1 : index
    %c0_65 = arith.constant 0 : index
    %c0_66 = arith.constant 0 : index
    %179 = vector.load %arg4[%c1_64, %c0_65, %c0_66] : memref<2x64x32xf32, #tpu.memory_space<vmem>>, vector<1x64x32xf32>
    %180 = vector.shape_cast %179 : vector<1x64x32xf32> to vector<64x32xf32>
    %c1_67 = arith.constant 1 : index
    %c0_68 = arith.constant 0 : index
    %c0_69 = arith.constant 0 : index
    %181 = vector.load %arg6[%c1_67, %c0_68, %c0_69] : memref<2x1x64xf32, #tpu.memory_space<vmem>>, vector<1x1x64xf32>
    %182 = vector.shape_cast %181 : vector<1x1x64xf32> to vector<1x64xf32>
    %cst_70 = arith.constant dense<0.000000e+00> : vector<16xf32>
    %183 = vector.multi_reduction <add>, %164, %cst_70 [1] : vector<16x32xf32> to vector<16xf32>
    %184 = vector.shape_cast %183 : vector<16xf32> to vector<16x1xf32>
    %cst_71 = arith.constant 3.200000e+01 : f32
    %185 = vector.broadcast %cst_71 : f32 to vector<16x1xf32>
    %186 = arith.divf %184, %185 : vector<16x1xf32>
    %187 = vector.broadcast %186 : vector<16x1xf32> to vector<16x32xf32>
    %188 = arith.subf %164, %187 : vector<16x32xf32>
    %189 = arith.mulf %188, %188 : vector<16x32xf32>
    %cst_72 = arith.constant dense<0.000000e+00> : vector<16xf32>
    %190 = vector.multi_reduction <add>, %189, %cst_72 [1] : vector<16x32xf32> to vector<16xf32>
    %191 = vector.shape_cast %190 : vector<16xf32> to vector<16x1xf32>
    %cst_73 = arith.constant 3.200000e+01 : f32
    %192 = vector.broadcast %cst_73 : f32 to vector<16x1xf32>
    %193 = arith.divf %191, %192 : vector<16x1xf32>
    %cst_74 = arith.constant 9.99999974E-6 : f32
    %194 = vector.broadcast %cst_74 : f32 to vector<16x1xf32>
    %195 = arith.addf %193, %194 : vector<16x1xf32>
    %196 = math.rsqrt %195 : vector<16x1xf32>
    %197 = vector.broadcast %196 : vector<16x1xf32> to vector<16x32xf32>
    %198 = arith.mulf %188, %197 : vector<16x32xf32>
    %199 = vector.broadcast %167 : vector<1x32xf32> to vector<16x32xf32>
    %200 = arith.mulf %198, %199 : vector<16x32xf32>
    %201 = vector.broadcast %168 : vector<1x32xf32> to vector<16x32xf32>
    %202 = arith.addf %200, %201 : vector<16x32xf32>
    %cst_75 = arith.constant dense<0.000000e+00> : vector<16x96xf32>
    %203 = tpu.matmul %202, %174, %cst_75 {dimension_numbers = #tpu.dot_dimension_numbers<[1], [0], [0], [1], [0, 0, 1, 1], [], []>} : vector<16x32xf32>, vector<32x96xf32>, vector<16x96xf32> -> vector<16x96xf32>
    %204 = vector.extract_strided_slice %203 {offsets = [0, 0], sizes = [8, 96], strides = [1, 1]} : vector<16x96xf32> to vector<8x96xf32>
    %205 = vector.extract_strided_slice %204 {offsets = [0, 0], sizes = [8, 16], strides = [1, 1]} : vector<8x96xf32> to vector<8x16xf32>
    %206 = vector.extract_strided_slice %204 {offsets = [0, 32], sizes = [8, 16], strides = [1, 1]} : vector<8x96xf32> to vector<8x16xf32>
    %207 = vector.extract_strided_slice %204 {offsets = [0, 64], sizes = [8, 16], strides = [1, 1]} : vector<8x96xf32> to vector<8x16xf32>
    %208 = vector.extract_strided_slice %204 {offsets = [0, 16], sizes = [8, 16], strides = [1, 1]} : vector<8x96xf32> to vector<8x16xf32>
    %209 = vector.extract_strided_slice %204 {offsets = [0, 48], sizes = [8, 16], strides = [1, 1]} : vector<8x96xf32> to vector<8x16xf32>
    %210 = vector.extract_strided_slice %204 {offsets = [0, 80], sizes = [8, 16], strides = [1, 1]} : vector<8x96xf32> to vector<8x16xf32>
    %211 = vector.extract_strided_slice %203 {offsets = [8, 0], sizes = [8, 96], strides = [1, 1]} : vector<16x96xf32> to vector<8x96xf32>
    %212 = vector.extract_strided_slice %211 {offsets = [0, 0], sizes = [8, 16], strides = [1, 1]} : vector<8x96xf32> to vector<8x16xf32>
    %213 = vector.extract_strided_slice %211 {offsets = [0, 32], sizes = [8, 16], strides = [1, 1]} : vector<8x96xf32> to vector<8x16xf32>
    %214 = vector.extract_strided_slice %211 {offsets = [0, 64], sizes = [8, 16], strides = [1, 1]} : vector<8x96xf32> to vector<8x16xf32>
    %215 = vector.extract_strided_slice %211 {offsets = [0, 16], sizes = [8, 16], strides = [1, 1]} : vector<8x96xf32> to vector<8x16xf32>
    %216 = vector.extract_strided_slice %211 {offsets = [0, 48], sizes = [8, 16], strides = [1, 1]} : vector<8x96xf32> to vector<8x16xf32>
    %217 = vector.extract_strided_slice %211 {offsets = [0, 80], sizes = [8, 16], strides = [1, 1]} : vector<8x96xf32> to vector<8x16xf32>
    %218 = vector.shape_cast %205 : vector<8x16xf32> to vector<1x8x16xf32>
    %219 = vector.shape_cast %208 : vector<8x16xf32> to vector<1x8x16xf32>
    %220 = vector.shape_cast %212 : vector<8x16xf32> to vector<1x8x16xf32>
    %221 = vector.shape_cast %215 : vector<8x16xf32> to vector<1x8x16xf32>
    %222 = tpu.concatenate %218, %219, %220, %221 in 0 : vector<1x8x16xf32>, vector<1x8x16xf32>, vector<1x8x16xf32>, vector<1x8x16xf32> -> vector<4x8x16xf32>
    %223 = vector.shape_cast %206 : vector<8x16xf32> to vector<1x8x16xf32>
    %224 = vector.shape_cast %209 : vector<8x16xf32> to vector<1x8x16xf32>
    %225 = vector.shape_cast %213 : vector<8x16xf32> to vector<1x8x16xf32>
    %226 = vector.shape_cast %216 : vector<8x16xf32> to vector<1x8x16xf32>
    %227 = tpu.concatenate %223, %224, %225, %226 in 0 : vector<1x8x16xf32>, vector<1x8x16xf32>, vector<1x8x16xf32>, vector<1x8x16xf32> -> vector<4x8x16xf32>
    %228 = vector.shape_cast %207 : vector<8x16xf32> to vector<1x8x16xf32>
    %229 = vector.shape_cast %210 : vector<8x16xf32> to vector<1x8x16xf32>
    %230 = vector.shape_cast %214 : vector<8x16xf32> to vector<1x8x16xf32>
    %231 = vector.shape_cast %217 : vector<8x16xf32> to vector<1x8x16xf32>
    %232 = tpu.concatenate %228, %229, %230, %231 in 0 : vector<1x8x16xf32>, vector<1x8x16xf32>, vector<1x8x16xf32>, vector<1x8x16xf32> -> vector<4x8x16xf32>
    "tpu.trace_start"() <{level = 10 : i32, message = "bid,bjd->bij"}> : () -> ()
    %cst_76 = arith.constant dense<0.000000e+00> : vector<4x8x8xf32>
    %233 = tpu.matmul %222, %227, %cst_76 {dimension_numbers = #tpu.dot_dimension_numbers<[2], [2], [1], [1], [0, 0, 0, 1, 1, 1], [0], [0]>} : vector<4x8x16xf32>, vector<4x8x16xf32>, vector<4x8x8xf32> -> vector<4x8x8xf32>
    "tpu.trace_stop"() : () -> ()
    %cst_77 = arith.constant dense<0xFF800000> : vector<4x8xf32>
    %234 = vector.multi_reduction <maximumf>, %233, %cst_77 [2] : vector<4x8x8xf32> to vector<4x8xf32>
    %235 = vector.shape_cast %234 : vector<4x8xf32> to vector<4x8x1xf32>
    %236 = vector.broadcast %235 : vector<4x8x1xf32> to vector<4x8x8xf32>
    %237 = arith.subf %233, %236 : vector<4x8x8xf32>
    %238 = math.exp %237 : vector<4x8x8xf32>
    %cst_78 = arith.constant dense<0.000000e+00> : vector<4x8xf32>
    %239 = vector.multi_reduction <add>, %238, %cst_78 [2] : vector<4x8x8xf32> to vector<4x8xf32>
    %240 = vector.shape_cast %239 : vector<4x8xf32> to vector<4x8x1xf32>
    %241 = tpu.reciprocal %240 {approx = true} : vector<4x8x1xf32> -> vector<4x8x1xf32>
    %242 = vector.broadcast %241 : vector<4x8x1xf32> to vector<4x8x8xf32>
    %243 = arith.mulf %238, %242 : vector<4x8x8xf32>
    "tpu.trace_start"() <{level = 10 : i32, message = "bij,bjd->bid"}> : () -> ()
    %cst_79 = arith.constant dense<0.000000e+00> : vector<4x8x16xf32>
    %244 = tpu.matmul %243, %232, %cst_79 {dimension_numbers = #tpu.dot_dimension_numbers<[2], [1], [1], [2], [0, 0, 0, 1, 1, 2], [0], [0]>} : vector<4x8x8xf32>, vector<4x8x16xf32>, vector<4x8x16xf32> -> vector<4x8x16xf32>
    "tpu.trace_stop"() : () -> ()
    %245 = vector.extract_strided_slice %244 {offsets = [0, 0, 0], sizes = [2, 8, 16], strides = [1, 1, 1]} : vector<4x8x16xf32> to vector<2x8x16xf32>
    "tpu.trace_start"() <{level = 10 : i32, message = "hnd,hde->hne"}> : () -> ()
    %cst_80 = arith.constant dense<0.000000e+00> : vector<2x8x32xf32>
    %246 = tpu.matmul %245, %176, %cst_80 {dimension_numbers = #tpu.dot_dimension_numbers<[2], [1], [1], [2], [0, 0, 0, 1, 1, 2], [0], [0]>} : vector<2x8x16xf32>, vector<2x16x32xf32>, vector<2x8x32xf32> -> vector<2x8x32xf32>
    "tpu.trace_stop"() : () -> ()
    %247 = vector.extract_strided_slice %246 {offsets = [0, 0, 0], sizes = [1, 8, 32], strides = [1, 1, 1]} : vector<2x8x32xf32> to vector<1x8x32xf32>
    %248 = vector.shape_cast %247 : vector<1x8x32xf32> to vector<8x32xf32>
    %249 = vector.extract_strided_slice %246 {offsets = [1, 0, 0], sizes = [1, 8, 32], strides = [1, 1, 1]} : vector<2x8x32xf32> to vector<1x8x32xf32>
    %250 = vector.shape_cast %249 : vector<1x8x32xf32> to vector<8x32xf32>
    %251 = arith.addf %248, %250 : vector<8x32xf32>
    %252 = vector.extract_strided_slice %244 {offsets = [2, 0, 0], sizes = [2, 8, 16], strides = [1, 1, 1]} : vector<4x8x16xf32> to vector<2x8x16xf32>
    "tpu.trace_start"() <{level = 10 : i32, message = "hnd,hde->hne"}> : () -> ()
    %cst_81 = arith.constant dense<0.000000e+00> : vector<2x8x32xf32>
    %253 = tpu.matmul %252, %176, %cst_81 {dimension_numbers = #tpu.dot_dimension_numbers<[2], [1], [1], [2], [0, 0, 0, 1, 1, 2], [0], [0]>} : vector<2x8x16xf32>, vector<2x16x32xf32>, vector<2x8x32xf32> -> vector<2x8x32xf32>
    "tpu.trace_stop"() : () -> ()
    %254 = vector.extract_strided_slice %253 {offsets = [0, 0, 0], sizes = [1, 8, 32], strides = [1, 1, 1]} : vector<2x8x32xf32> to vector<1x8x32xf32>
    %255 = vector.shape_cast %254 : vector<1x8x32xf32> to vector<8x32xf32>
    %256 = vector.extract_strided_slice %253 {offsets = [1, 0, 0], sizes = [1, 8, 32], strides = [1, 1, 1]} : vector<2x8x32xf32> to vector<1x8x32xf32>
    %257 = vector.shape_cast %256 : vector<1x8x32xf32> to vector<8x32xf32>
    %258 = arith.addf %255, %257 : vector<8x32xf32>
    %259 = tpu.concatenate %251, %258 in 0 : vector<8x32xf32>, vector<8x32xf32> -> vector<16x32xf32>
    %260 = arith.addf %164, %259 : vector<16x32xf32>
    %261 = vector.broadcast %171 : vector<1x32xf32> to vector<16x32xf32>
    %262 = arith.addf %260, %261 : vector<16x32xf32>
    %cst_82 = arith.constant dense<0.000000e+00> : vector<16xf32>
    %263 = vector.multi_reduction <add>, %262, %cst_82 [1] : vector<16x32xf32> to vector<16xf32>
    %264 = vector.shape_cast %263 : vector<16xf32> to vector<16x1xf32>
    %cst_83 = arith.constant 3.200000e+01 : f32
    %265 = vector.broadcast %cst_83 : f32 to vector<16x1xf32>
    %266 = arith.divf %264, %265 : vector<16x1xf32>
    %267 = vector.broadcast %266 : vector<16x1xf32> to vector<16x32xf32>
    %268 = arith.subf %262, %267 : vector<16x32xf32>
    %269 = arith.mulf %268, %268 : vector<16x32xf32>
    %cst_84 = arith.constant dense<0.000000e+00> : vector<16xf32>
    %270 = vector.multi_reduction <add>, %269, %cst_84 [1] : vector<16x32xf32> to vector<16xf32>
    %271 = vector.shape_cast %270 : vector<16xf32> to vector<16x1xf32>
    %cst_85 = arith.constant 3.200000e+01 : f32
    %272 = vector.broadcast %cst_85 : f32 to vector<16x1xf32>
    %273 = arith.divf %271, %272 : vector<16x1xf32>
    %cst_86 = arith.constant 9.99999974E-6 : f32
    %274 = vector.broadcast %cst_86 : f32 to vector<16x1xf32>
    %275 = arith.addf %273, %274 : vector<16x1xf32>
    %276 = math.rsqrt %275 : vector<16x1xf32>
    %277 = vector.broadcast %276 : vector<16x1xf32> to vector<16x32xf32>
    %278 = arith.mulf %268, %277 : vector<16x32xf32>
    %279 = vector.broadcast %169 : vector<1x32xf32> to vector<16x32xf32>
    %280 = arith.mulf %278, %279 : vector<16x32xf32>
    %281 = vector.broadcast %170 : vector<1x32xf32> to vector<16x32xf32>
    %282 = arith.addf %280, %281 : vector<16x32xf32>
    %cst_87 = arith.constant dense<0.000000e+00> : vector<16x64xf32>
    %283 = tpu.matmul %282, %178, %cst_87 {dimension_numbers = #tpu.dot_dimension_numbers<[1], [0], [0], [1], [0, 0, 1, 1], [], []>} : vector<16x32xf32>, vector<32x64xf32>, vector<16x64xf32> -> vector<16x64xf32>
    %284 = vector.broadcast %182 : vector<1x64xf32> to vector<16x64xf32>
    %285 = arith.addf %283, %284 : vector<16x64xf32>
    %cst_88 = arith.constant 5.000000e-01 : f32
    %286 = vector.broadcast %cst_88 : f32 to vector<16x64xf32>
    %287 = arith.mulf %286, %285 : vector<16x64xf32>
    %cst_89 = arith.constant 0.707106769 : f32
    %288 = vector.broadcast %cst_89 : f32 to vector<16x64xf32>
    %289 = arith.mulf %285, %288 : vector<16x64xf32>
    %290 = math.absf %289 : vector<16x64xf32>
    %cst_90 = arith.constant 0.327591091 : f32
    %291 = vector.broadcast %cst_90 : f32 to vector<16x64xf32>
    %292 = arith.mulf %291, %290 : vector<16x64xf32>
    %cst_91 = arith.constant 1.000000e+00 : f32
    %293 = vector.broadcast %cst_91 : f32 to vector<16x64xf32>
    %294 = arith.addf %293, %292 : vector<16x64xf32>
    %295 = tpu.reciprocal %294 : vector<16x64xf32> -> vector<16x64xf32>
    %cst_92 = arith.constant 1.06140542 : f32
    %296 = vector.broadcast %cst_92 : f32 to vector<16x64xf32>
    %297 = arith.mulf %296, %295 : vector<16x64xf32>
    %cst_93 = arith.constant -1.45315206 : f32
    %298 = vector.broadcast %cst_93 : f32 to vector<16x64xf32>
    %299 = arith.addf %297, %298 : vector<16x64xf32>
    %300 = arith.mulf %299, %295 : vector<16x64xf32>
    %cst_94 = arith.constant 1.42141378 : f32
    %301 = vector.broadcast %cst_94 : f32 to vector<16x64xf32>
    %302 = arith.addf %300, %301 : vector<16x64xf32>
    %303 = arith.mulf %302, %295 : vector<16x64xf32>
    %cst_95 = arith.constant -0.284496725 : f32
    %304 = vector.broadcast %cst_95 : f32 to vector<16x64xf32>
    %305 = arith.addf %303, %304 : vector<16x64xf32>
    %306 = arith.mulf %305, %295 : vector<16x64xf32>
    %cst_96 = arith.constant 0.254829586 : f32
    %307 = vector.broadcast %cst_96 : f32 to vector<16x64xf32>
    %308 = arith.addf %306, %307 : vector<16x64xf32>
    %309 = arith.mulf %308, %295 : vector<16x64xf32>
    %cst_97 = arith.constant 0.000000e+00 : f32
    %310 = vector.broadcast %cst_97 : f32 to vector<16x64xf32>
    %311 = arith.subf %310, %290 : vector<16x64xf32>
    %312 = arith.mulf %311, %290 : vector<16x64xf32>
    %313 = math.exp %312 : vector<16x64xf32>
    %314 = arith.mulf %309, %313 : vector<16x64xf32>
    %cst_98 = arith.constant 1.000000e+00 : f32
    %315 = vector.broadcast %cst_98 : f32 to vector<16x64xf32>
    %316 = arith.subf %315, %314 : vector<16x64xf32>
    %cst_99 = arith.constant 0.000000e+00 : f32
    %317 = vector.broadcast %cst_99 : f32 to vector<16x64xf32>
    %318 = arith.cmpf oge, %289, %317 : vector<16x64xf32>
    %cst_100 = arith.constant 0.000000e+00 : f32
    %319 = vector.broadcast %cst_100 : f32 to vector<16x64xf32>
    %320 = arith.subf %319, %316 : vector<16x64xf32>
    %321 = arith.select %318, %316, %320 : vector<16x64xi1>, vector<16x64xf32>
    %cst_101 = arith.constant 1.000000e+00 : f32
    %322 = vector.broadcast %cst_101 : f32 to vector<16x64xf32>
    %323 = arith.addf %322, %321 : vector<16x64xf32>
    %324 = arith.mulf %287, %323 : vector<16x64xf32>
    %cst_102 = arith.constant dense<0.000000e+00> : vector<16x32xf32>
    %325 = tpu.matmul %324, %180, %cst_102 {dimension_numbers = #tpu.dot_dimension_numbers<[1], [0], [0], [1], [0, 0, 1, 1], [], []>} : vector<16x64xf32>, vector<64x32xf32>, vector<16x32xf32> -> vector<16x32xf32>
    %326 = vector.broadcast %172 : vector<1x32xf32> to vector<16x32xf32>
    %327 = arith.addf %325, %326 : vector<16x32xf32>
    %328 = arith.addf %262, %327 : vector<16x32xf32>
    %c0_103 = arith.constant 0 : index
    %c0_104 = arith.constant 0 : index
    %329 = vector.load %arg7[%c0_103, %c0_104] : memref<16x32xf32, #tpu.memory_space<vmem>>, vector<16x32xf32>
    tpu.vector_store %arg7[%c0_103, %c0_104], %328 {strides = array<i32>} : memref<16x32xf32, #tpu.memory_space<vmem>>, vector<16x32xf32>,
    return
  }
}

</mosaic_0001>

<llo_original>
// kernel: tpu_custom_call.1
$region0: #{tpu_custom_call.1}
  #allocation0 [shape = 'u32[]', space=smem, size = 0x4, offset = 0x4, fixed_abs, tag = 'smem constant byte address 0x4 - core index']
  #allocation1 [shape = 'u32[72,128]{1,0:T(1,128)}', space=vmem, size = 0x9000, scoped, tag = 'internal scratch']
  %s0 = inlined_call_operand.vmem [shape: f32[16,32], index: 0, kind: input, shape index: {}]
  %s1 = inlined_call_operand.vmem [shape: f32[2,32,96], index: 1, kind: input, shape index: {}]
  %s2 = inlined_call_operand.vmem [shape: f32[2,2,16,32], index: 2, kind: input, shape index: {}]
  %s3 = inlined_call_operand.vmem [shape: f32[2,32,64], index: 3, kind: input, shape index: {}]
  %s4 = inlined_call_operand.vmem [shape: f32[2,64,32], index: 4, kind: input, shape index: {}]
  %s5 = inlined_call_operand.vmem [shape: f32[2,6,32], index: 5, kind: input, shape index: {}]
  %s6 = inlined_call_operand.vmem [shape: f32[2,1,64], index: 6, kind: input, shape index: {}]
  %s7 = inlined_call_operand.hbm [shape: f32[16,32], index: 7, kind: output, shape index: {}]
  %s8 = sld [smem:[#allocation0]]
  $region38: #{tpu_custom_call.1} parent=0
    _
  %s10 = ssub.s32 1, %s8
  %s11 = scalar_select 0, %s10, %s8
  $region1: #{tpu_custom_call.1} parent=0
    #allocation2 [shape = 'u8[8192]{0}', space=vmem, size = 0x2000, scoped, tag = 'output window, operand 0, single buffered']
    #allocation3 [shape = 's32[1]{0}', space=sflag, size = 0x4, scoped, tag = 'scoped memory for tpu_custom_call.1']
    %12 = vsyncpa [#allocation3], 0
    // Predicated region
    $region2: #{tpu_custom_call.1} parent=1 // pred_check
      _
    $region3: #{tpu_custom_call.1} parent=1 // pred_check_branch
      %14 = sbr.rel (0) target = $region5
    $region4: #{tpu_custom_call.1} parent=1 // pred_region
      _
    $region5: #{tpu_custom_call.1} parent=1 // pred_fallthru
      _
    // Predicated region
    $region6: #{tpu_custom_call.1} parent=1 // pred_check
      _
    $region7: #{tpu_custom_call.1} parent=1 // pred_check_branch
      %16 = sbr.rel (0) target = $region9
    $region8: #{tpu_custom_call.1} parent=1 // pred_region
      _
    $region9: #{tpu_custom_call.1} parent=1 // pred_fallthru
      _
    // Predicated region
    $region10: #{tpu_custom_call.1} parent=1 // pred_check
      _
    $region11: #{tpu_custom_call.1} parent=1 // pred_check_branch
      %18 = sbr.rel (0) target = $region13
    $region12: #{tpu_custom_call.1} parent=1 // pred_region
      _
    $region13: #{tpu_custom_call.1} parent=1 // pred_fallthru
      _
    // Predicated region
    $region14: #{tpu_custom_call.1} parent=1 // pred_check
      _
    $region15: #{tpu_custom_call.1} parent=1 // pred_check_branch
      %20 = sbr.rel (0) target = $region17
    $region16: #{tpu_custom_call.1} parent=1 // pred_region
      _
    $region17: #{tpu_custom_call.1} parent=1 // pred_fallthru
      _
    // Predicated region
    $region18: #{tpu_custom_call.1} parent=1 // pred_check
      _
    $region19: #{tpu_custom_call.1} parent=1 // pred_check_branch
      %22 = sbr.rel (0) target = $region21
    $region20: #{tpu_custom_call.1} parent=1 // pred_region
      _
    $region21: #{tpu_custom_call.1} parent=1 // pred_fallthru
      _
    // Predicated region
    $region22: #{tpu_custom_call.1} parent=1 // pred_check
      _
    $region23: #{tpu_custom_call.1} parent=1 // pred_check_branch
      %24 = sbr.rel (0) target = $region25
    $region24: #{tpu_custom_call.1} parent=1 // pred_region
      _
    $region25: #{tpu_custom_call.1} parent=1 // pred_fallthru
      _
    // Predicated region
    $region26: #{tpu_custom_call.1} parent=1 // pred_check
      _
    $region27: #{tpu_custom_call.1} parent=1 // pred_check_branch
      %26 = sbr.rel (0) target = $region29
    $region28: #{tpu_custom_call.1} parent=1 // pred_region
      _
    $region29: #{tpu_custom_call.1} parent=1 // pred_fallthru
      _
    %v27 = vld [vmem:[%s0] sm:$0xff]
    %v28 = vld [vmem:[%s0 + $0x8] sm:$0xff]
    %v29 = vld [vmem:[%s5] sm:$0x3f]
    %v30 = vld [vmem:[%s1] sm:$0xff]
    %v31 = vld [vmem:[%s1 + $0x8] sm:$0xff]
    %v32 = vld [vmem:[%s1 + $0x10] sm:$0xff]
    %v33 = vld [vmem:[%s1 + $0x18] sm:$0xff]
    %v34 = vld [vmem:[%s2] sm:$0xff]
    %v35 = vld [vmem:[%s2 + $0x8] sm:$0xff]
    %v36 = vld [vmem:[%s2 + $0x10] sm:$0xff]
    %v37 = vld [vmem:[%s2 + $0x18] sm:$0xff]
    %v38 = vld [vmem:[%s3] sm:$0xff]
    %v39 = vld [vmem:[%s3 + $0x8] sm:$0xff]
    %v40 = vld [vmem:[%s3 + $0x10] sm:$0xff]
    %v41 = vld [vmem:[%s3 + $0x18] sm:$0xff]
    %v42 = vld [vmem:[%s4] sm:$0xff]
    %v43 = vld [vmem:[%s4 + $0x8] sm:$0xff]
    %v44 = vld [vmem:[%s4 + $0x10] sm:$0xff]
    %v45 = vld [vmem:[%s4 + $0x18] sm:$0xff]
    %v46 = vld [vmem:[%s4 + $0x20] sm:$0xff]
    %v47 = vld [vmem:[%s4 + $0x28] sm:$0xff]
    %v48 = vld [vmem:[%s4 + $0x30] sm:$0xff]
    %v49 = vld [vmem:[%s4 + $0x38] sm:$0xff]
    %v50 = vld [vmem:[%s6] sm:$0x1]
    %vm51 = vcmask 261120
    %v52 = vsel %vm51, %v27, 0.0
    %53 = vadd.xlane.f32.xlu0 %v52
    %v54 = vpop.xlane.xlu0 %53
    %v55 = vsel %vm51, %v28, 0.0
    %56 = vadd.xlane.f32.xlu0 %v55
    %v57 = vpop.xlane.xlu0 %56
    %v58 = vrcp.pop 32.0
    %v59 = vmul.f32 32.0, %v58
    %v60 = vsub.f32 1.0, %v59
    %v61 = vmul.f32 %v58, %v60
    %v62 = vadd.f32 %v58, %v61
    %vm63 = vweird.f32 %v58
    %v64 = vsel %vm63, %v58, %v62
    %v65 = vmul.f32 %v54, %v64
    %v66 = vmul.f32 %v57, %v64
    %v67 = vsub.f32 %v27, %v65
    %v68 = vsub.f32 %v28, %v66
    %v69 = vmul.f32 %v67, %v67
    %v70 = vmul.f32 %v68, %v68
    %v71 = vsel %vm51, %v69, 0.0
    %72 = vadd.xlane.f32.xlu0 %v71
    %v73 = vpop.xlane.xlu0 %72
    %v74 = vsel %vm51, %v70, 0.0
    %75 = vadd.xlane.f32.xlu0 %v74
    %v76 = vpop.xlane.xlu0 %75
    %v77 = vmul.f32 %v73, %v64
    %v78 = vmul.f32 %v76, %v64
    %v79 = vadd.f32 %v77, 1e-05
    %v80 = vadd.f32 %v78, 1e-05
    %v81 = vrsqrt.pop %v79
    %v82 = vmul.f32 %v81, %v79
    %v83 = vmul.f32 %v82, %v81
    %v84 = vmul.f32 0.5, %v83
    %v85 = vsub.f32 1.5, %v84
    %v86 = vmul.f32 %v81, %v85
    %vm87 = vweird.f32 %v79
    %vm88 = vweird.f32 %v81
    %vm89 = vmor %vm87, %vm88
    %v90 = vsel %vm89, %v81, %v86
    %v91 = vrsqrt.pop %v80
    %v92 = vmul.f32 %v91, %v80
    %v93 = vmul.f32 %v92, %v91
    %v94 = vmul.f32 0.5, %v93
    %v95 = vsub.f32 1.5, %v94
    %v96 = vmul.f32 %v91, %v95
    %vm97 = vweird.f32 %v80
    %vm98 = vweird.f32 %v91
    %vm99 = vmor %vm97, %vm98
    %v100 = vsel %vm99, %v91, %v96
    %v101 = vmul.f32 %v67, %v90
    %v102 = vmul.f32 %v68, %v100
    %v103 = vperm.slane %v29, 0
    %v104 = vmul.f32 %v101, %v103
    %v105 = vmul.f32 %v102, %v103
    %v106 = vperm.slane %v29, 1
    %v107 = vadd.f32 %v104, %v106
    %v108 = vadd.f32 %v105, %v106
    %v110 = vsel %vm51, %v107, 0
    %v113 = vsel %vm51, %v108, 0
    %115 = vmatpush.msra.mxu0 0.0
    %116 = vmatpush.msra.mxu0 0.0
    %117 = vmatpush.msra.mxu0 0.0
    %118 = vmatpush.msra.mxu0 0.0
    %119 = vmatpush.msra.mxu0 0.0
    %120 = vmatpush.msra.mxu0 0.0
    %121 = vmatpush.msra.mxu0 0.0
    %122 = vmatpush.msra.mxu0 0.0
    %123 = vmatpush.msra.mxu0 0.0
    %124 = vmatpush.msra.mxu0 0.0
    %125 = vmatpush.msra.mxu0 0.0
    %126 = vmatpush.msra.mxu0 0.0
    %127 = vmatpush.msra.mxu0 %v33
    %128 = vmatpush.msra.mxu0 %v32
    %129 = vmatpush.msra.mxu0 %v31
    %130 = vmatpush.msra.mxu0 %v30
    %131 = vmatmul.f32.gmra.mxu0 %v110
    %v132 = vpop.f32.mrf.mxu0
    %v133 = vadd.f32 0.0, %v132
    %134 = vmatmul.f32.gmra.mxu0 %v113
    %v135 = vpop.f32.mrf.mxu0
    %v136 = vadd.f32 0.0, %v135
    %137 = vdwg.mxu0
    %139 = vrot.lane.b32.xlu0 %v133, 112
    %v140 = vpop.permute.xlu0 %139
    %142 = vrot.lane.b32.xlu0 %v136, 112
    %v143 = vpop.permute.xlu0 %142
    %144 = vrot.lane.b32.xlu0 %v133, 96
    %v145 = vpop.permute.xlu0 %144
    %vm146 = vcmask 130048
    %v147 = vsel %vm146, %v133, 0
    %v149 = vsel %vm146, %v145, 0
    %151 = vmatpush.xpose.msra.mxu0 0.0
    %152 = vmatpush.xpose.msra.mxu0 0.0
    %153 = vmatpush.xpose.msra.mxu0 0.0
    %154 = vmatpush.xpose.msra.mxu0 0.0
    %155 = vmatpush.xpose.msra.mxu0 0.0
    %156 = vmatpush.xpose.msra.mxu0 0.0
    %157 = vmatpush.xpose.msra.mxu0 0.0
    %158 = vmatpush.xpose.msra.mxu0 0.0
    %159 = vmatpush.xpose.msra.mxu0 0.0
    %160 = vmatpush.xpose.msra.mxu0 0.0
    %161 = vmatpush.xpose.msra.mxu0 0.0
    %162 = vmatpush.xpose.msra.mxu0 0.0
    %163 = vmatpush.xpose.msra.mxu0 0.0
    %164 = vmatpush.xpose.msra.mxu0 0.0
    %165 = vmatpush.xpose.msra.mxu0 0.0
    %166 = vmatpush.xpose.msra.mxu0 %v149
    %167 = vmatmul.f32.gmra.mxu0 %v147
    %v168 = vpop.f32.mrf.mxu0
    %v169 = vadd.f32 0.0, %v168
    %170 = vdwg.mxu0
    %171 = vrot.lane.b32.xlu0 %v140, 96
    %v172 = vpop.permute.xlu0 %171
    %v173 = vsel %vm146, %v140, 0
    %v175 = vsel %vm146, %v172, 0
    %177 = vmatpush.xpose.msra.mxu0 0.0
    %178 = vmatpush.xpose.msra.mxu0 0.0
    %179 = vmatpush.xpose.msra.mxu0 0.0
    %180 = vmatpush.xpose.msra.mxu0 0.0
    %181 = vmatpush.xpose.msra.mxu0 0.0
    %182 = vmatpush.xpose.msra.mxu0 0.0
    %183 = vmatpush.xpose.msra.mxu0 0.0
    %184 = vmatpush.xpose.msra.mxu0 0.0
    %185 = vmatpush.xpose.msra.mxu0 0.0
    %186 = vmatpush.xpose.msra.mxu0 0.0
    %187 = vmatpush.xpose.msra.mxu0 0.0
    %188 = vmatpush.xpose.msra.mxu0 0.0
    %189 = vmatpush.xpose.msra.mxu0 0.0
    %190 = vmatpush.xpose.msra.mxu0 0.0
    %191 = vmatpush.xpose.msra.mxu0 0.0
    %192 = vmatpush.xpose.msra.mxu0 %v175
    %193 = vmatmul.f32.gmra.mxu0 %v173
    %v194 = vpop.f32.mrf.mxu0
    %v195 = vadd.f32 0.0, %v194
    %196 = vdwg.mxu0
    %197 = vrot.lane.b32.xlu0 %v136, 96
    %v198 = vpop.permute.xlu0 %197
    %v199 = vsel %vm146, %v136, 0
    %v201 = vsel %vm146, %v198, 0
    %203 = vmatpush.xpose.msra.mxu0 0.0
    %204 = vmatpush.xpose.msra.mxu0 0.0
    %205 = vmatpush.xpose.msra.mxu0 0.0
    %206 = vmatpush.xpose.msra.mxu0 0.0
    %207 = vmatpush.xpose.msra.mxu0 0.0
    %208 = vmatpush.xpose.msra.mxu0 0.0
    %209 = vmatpush.xpose.msra.mxu0 0.0
    %210 = vmatpush.xpose.msra.mxu0 0.0
    %211 = vmatpush.xpose.msra.mxu0 0.0
    %212 = vmatpush.xpose.msra.mxu0 0.0
    %213 = vmatpush.xpose.msra.mxu0 0.0
    %214 = vmatpush.xpose.msra.mxu0 0.0
    %215 = vmatpush.xpose.msra.mxu0 0.0
    %216 = vmatpush.xpose.msra.mxu0 0.0
    %217 = vmatpush.xpose.msra.mxu0 0.0
    %218 = vmatpush.xpose.msra.mxu0 %v201
    %219 = vmatmul.f32.gmra.mxu0 %v199
    %v220 = vpop.f32.mrf.mxu0
    %v221 = vadd.f32 0.0, %v220
    %222 = vdwg.mxu0
    %223 = vrot.lane.b32.xlu0 %v143, 96
    %v224 = vpop.permute.xlu0 %223
    %v225 = vsel %vm146, %v143, 0
    %v227 = vsel %vm146, %v224, 0
    %229 = vmatpush.xpose.msra.mxu0 0.0
    %230 = vmatpush.xpose.msra.mxu0 0.0
    %231 = vmatpush.xpose.msra.mxu0 0.0
    %232 = vmatpush.xpose.msra.mxu0 0.0
    %233 = vmatpush.xpose.msra.mxu0 0.0
    %234 = vmatpush.xpose.msra.mxu0 0.0
    %235 = vmatpush.xpose.msra.mxu0 0.0
    %236 = vmatpush.xpose.msra.mxu0 0.0
    %237 = vmatpush.xpose.msra.mxu0 0.0
    %238 = vmatpush.xpose.msra.mxu0 0.0
    %239 = vmatpush.xpose.msra.mxu0 0.0
    %240 = vmatpush.xpose.msra.mxu0 0.0
    %241 = vmatpush.xpose.msra.mxu0 0.0
    %242 = vmatpush.xpose.msra.mxu0 0.0
    %243 = vmatpush.xpose.msra.mxu0 0.0
    %244 = vmatpush.xpose.msra.mxu0 %v227
    %245 = vmatmul.f32.gmra.mxu0 %v225
    %v246 = vpop.f32.mrf.mxu0
    %v247 = vadd.f32 0.0, %v246
    %248 = vdwg.mxu0
    %vm249 = vcmask 64512
    %v250 = vsel %vm249, %v169, -inf
    %251 = vmax.xlane.f32.xlu0 %v250
    %v252 = vpop.xlane.xlu0 %251
    %v253 = vsel %vm249, %v195, -inf
    %254 = vmax.xlane.f32.xlu0 %v253
    %v255 = vpop.xlane.xlu0 %254
    %v256 = vsel %vm249, %v221, -inf
    %257 = vmax.xlane.f32.xlu0 %v256
    %v258 = vpop.xlane.xlu0 %257
    %v259 = vsel %vm249, %v247, -inf
    %260 = vmax.xlane.f32.xlu0 %v259
    %v261 = vpop.xlane.xlu0 %260
    %v262 = vsub.f32 %v169, %v252
    %v263 = vsub.f32 %v195, %v255
    %v264 = vsub.f32 %v221, %v258
    %v265 = vsub.f32 %v247, %v261
    %v266 = vmul.f32 %v262, 1.442695
    %v267 = vpow.pop %v266
    %v268 = vmul.f32 %v263, 1.442695
    %v269 = vpow.pop %v268
    %v270 = vmul.f32 %v264, 1.442695
    %v271 = vpow.pop %v270
    %v272 = vmul.f32 %v265, 1.442695
    %v273 = vpow.pop %v272
    %v274 = vsel %vm249, %v267, 0.0
    %275 = vadd.xlane.f32.xlu0 %v274
    %v276 = vpop.xlane.xlu0 %275
    %v277 = vsel %vm249, %v269, 0.0
    %278 = vadd.xlane.f32.xlu0 %v277
    %v279 = vpop.xlane.xlu0 %278
    %v280 = vsel %vm249, %v271, 0.0
    %281 = vadd.xlane.f32.xlu0 %v280
    %v282 = vpop.xlane.xlu0 %281
    %v283 = vsel %vm249, %v273, 0.0
    %284 = vadd.xlane.f32.xlu0 %v283
    %v285 = vpop.xlane.xlu0 %284
    %v286 = vrcp.pop %v276
    %v287 = vrcp.pop %v279
    %v288 = vrcp.pop %v282
    %v289 = vrcp.pop %v285
    %v290 = vmul.f32 %v267, %v286
    %v291 = vmul.f32 %v269, %v287
    %v292 = vmul.f32 %v271, %v288
    %v293 = vmul.f32 %v273, %v289
    %294 = vrot.lane.b32.xlu0 %v133, 64
    %v295 = vpop.permute.xlu0 %294
    %v298 = vsel %vm249, %v290, 0
    %300 = vmatpush.msra.mxu0 0.0
    %301 = vmatpush.msra.mxu0 0.0
    %302 = vmatpush.msra.mxu0 0.0
    %303 = vmatpush.msra.mxu0 0.0
    %304 = vmatpush.msra.mxu0 0.0
    %305 = vmatpush.msra.mxu0 0.0
    %306 = vmatpush.msra.mxu0 0.0
    %307 = vmatpush.msra.mxu0 0.0
    %308 = vmatpush.msra.mxu0 0.0
    %309 = vmatpush.msra.mxu0 0.0
    %310 = vmatpush.msra.mxu0 0.0
    %311 = vmatpush.msra.mxu0 0.0
    %312 = vmatpush.msra.mxu0 0.0
    %313 = vmatpush.msra.mxu0 0.0
    %314 = vmatpush.msra.mxu0 0.0
    %315 = vmatpush.msra.mxu0 %v295
    %316 = vmatmul.f32.gmra.mxu0 %v298
    %v317 = vpop.f32.mrf.mxu0
    %v318 = vadd.f32 0.0, %v317
    %319 = vdwg.mxu0
    %320 = vrot.lane.b32.xlu0 %v140, 64
    %v321 = vpop.permute.xlu0 %320
    %v324 = vsel %vm249, %v291, 0
    %326 = vmatpush.msra.mxu0 0.0
    %327 = vmatpush.msra.mxu0 0.0
    %328 = vmatpush.msra.mxu0 0.0
    %329 = vmatpush.msra.mxu0 0.0
    %330 = vmatpush.msra.mxu0 0.0
    %331 = vmatpush.msra.mxu0 0.0
    %332 = vmatpush.msra.mxu0 0.0
    %333 = vmatpush.msra.mxu0 0.0
    %334 = vmatpush.msra.mxu0 0.0
    %335 = vmatpush.msra.mxu0 0.0
    %336 = vmatpush.msra.mxu0 0.0
    %337 = vmatpush.msra.mxu0 0.0
    %338 = vmatpush.msra.mxu0 0.0
    %339 = vmatpush.msra.mxu0 0.0
    %340 = vmatpush.msra.mxu0 0.0
    %341 = vmatpush.msra.mxu0 %v321
    %342 = vmatmul.f32.gmra.mxu0 %v324
    %v343 = vpop.f32.mrf.mxu0
    %v344 = vadd.f32 0.0, %v343
    %345 = vdwg.mxu0
    %346 = vrot.lane.b32.xlu0 %v136, 64
    %v347 = vpop.permute.xlu0 %346
    %v350 = vsel %vm249, %v292, 0
    %352 = vmatpush.msra.mxu0 0.0
    %353 = vmatpush.msra.mxu0 0.0
    %354 = vmatpush.msra.mxu0 0.0
    %355 = vmatpush.msra.mxu0 0.0
    %356 = vmatpush.msra.mxu0 0.0
    %357 = vmatpush.msra.mxu0 0.0
    %358 = vmatpush.msra.mxu0 0.0
    %359 = vmatpush.msra.mxu0 0.0
    %360 = vmatpush.msra.mxu0 0.0
    %361 = vmatpush.msra.mxu0 0.0
    %362 = vmatpush.msra.mxu0 0.0
    %363 = vmatpush.msra.mxu0 0.0
    %364 = vmatpush.msra.mxu0 0.0
    %365 = vmatpush.msra.mxu0 0.0
    %366 = vmatpush.msra.mxu0 0.0
    %367 = vmatpush.msra.mxu0 %v347
    %368 = vmatmul.f32.gmra.mxu0 %v350
    %v369 = vpop.f32.mrf.mxu0
    %v370 = vadd.f32 0.0, %v369
    %371 = vdwg.mxu0
    %372 = vrot.lane.b32.xlu0 %v143, 64
    %v373 = vpop.permute.xlu0 %372
    %v376 = vsel %vm249, %v293, 0
    %378 = vmatpush.msra.mxu0 0.0
    %379 = vmatpush.msra.mxu0 0.0
    %380 = vmatpush.msra.mxu0 0.0
    %381 = vmatpush.msra.mxu0 0.0
    %382 = vmatpush.msra.mxu0 0.0
    %383 = vmatpush.msra.mxu0 0.0
    %384 = vmatpush.msra.mxu0 0.0
    %385 = vmatpush.msra.mxu0 0.0
    %386 = vmatpush.msra.mxu0 0.0
    %387 = vmatpush.msra.mxu0 0.0
    %388 = vmatpush.msra.mxu0 0.0
    %389 = vmatpush.msra.mxu0 0.0
    %390 = vmatpush.msra.mxu0 0.0
    %391 = vmatpush.msra.mxu0 0.0
    %392 = vmatpush.msra.mxu0 0.0
    %393 = vmatpush.msra.mxu0 %v373
    %394 = vmatmul.f32.gmra.mxu0 %v376
    %v395 = vpop.f32.mrf.mxu0
    %v396 = vadd.f32 0.0, %v395
    %397 = vdwg.mxu0
    %v399 = vsel %vm146, %v318, 0
    %401 = vmatpush.msra.mxu0 0.0
    %402 = vmatpush.msra.mxu0 0.0
    %403 = vmatpush.msra.mxu0 0.0
    %404 = vmatpush.msra.mxu0 0.0
    %405 = vmatpush.msra.mxu0 0.0
    %406 = vmatpush.msra.mxu0 0.0
    %407 = vmatpush.msra.mxu0 0.0
    %408 = vmatpush.msra.mxu0 0.0
    %409 = vmatpush.msra.mxu0 0.0
    %410 = vmatpush.msra.mxu0 0.0
    %411 = vmatpush.msra.mxu0 0.0
    %412 = vmatpush.msra.mxu0 0.0
    %413 = vmatpush.msra.mxu0 0.0
    %414 = vmatpush.msra.mxu0 0.0
    %415 = vmatpush.msra.mxu0 %v35
    %416 = vmatpush.msra.mxu0 %v34
    %417 = vmatmul.f32.gmra.mxu0 %v399
    %v418 = vpop.f32.mrf.mxu0
    %v419 = vadd.f32 0.0, %v418
    %420 = vdwg.mxu0
    %v422 = vsel %vm146, %v344, 0
    %424 = vmatpush.msra.mxu0 0.0
    %425 = vmatpush.msra.mxu0 0.0
    %426 = vmatpush.msra.mxu0 0.0
    %427 = vmatpush.msra.mxu0 0.0
    %428 = vmatpush.msra.mxu0 0.0
    %429 = vmatpush.msra.mxu0 0.0
    %430 = vmatpush.msra.mxu0 0.0
    %431 = vmatpush.msra.mxu0 0.0
    %432 = vmatpush.msra.mxu0 0.0
    %433 = vmatpush.msra.mxu0 0.0
    %434 = vmatpush.msra.mxu0 0.0
    %435 = vmatpush.msra.mxu0 0.0
    %436 = vmatpush.msra.mxu0 0.0
    %437 = vmatpush.msra.mxu0 0.0
    %438 = vmatpush.msra.mxu0 %v37
    %439 = vmatpush.msra.mxu0 %v36
    %440 = vmatmul.f32.gmra.mxu0 %v422
    %v441 = vpop.f32.mrf.mxu0
    %v442 = vadd.f32 0.0, %v441
    %443 = vdwg.mxu0
    %v444 = vadd.f32 %v419, %v442
    %v446 = vsel %vm146, %v370, 0
    %448 = vmatpush.msra.mxu0 0.0
    %449 = vmatpush.msra.mxu0 0.0
    %450 = vmatpush.msra.mxu0 0.0
    %451 = vmatpush.msra.mxu0 0.0
    %452 = vmatpush.msra.mxu0 0.0
    %453 = vmatpush.msra.mxu0 0.0
    %454 = vmatpush.msra.mxu0 0.0
    %455 = vmatpush.msra.mxu0 0.0
    %456 = vmatpush.msra.mxu0 0.0
    %457 = vmatpush.msra.mxu0 0.0
    %458 = vmatpush.msra.mxu0 0.0
    %459 = vmatpush.msra.mxu0 0.0
    %460 = vmatpush.msra.mxu0 0.0
    %461 = vmatpush.msra.mxu0 0.0
    %462 = vmatpush.msra.mxu0 %v35
    %463 = vmatpush.msra.mxu0 %v34
    %464 = vmatmul.f32.gmra.mxu0 %v446
    %v465 = vpop.f32.mrf.mxu0
    %v466 = vadd.f32 0.0, %v465
    %467 = vdwg.mxu0
    %v469 = vsel %vm146, %v396, 0
    %471 = vmatpush.msra.mxu0 0.0
    %472 = vmatpush.msra.mxu0 0.0
    %473 = vmatpush.msra.mxu0 0.0
    %474 = vmatpush.msra.mxu0 0.0
    %475 = vmatpush.msra.mxu0 0.0
    %476 = vmatpush.msra.mxu0 0.0
    %477 = vmatpush.msra.mxu0 0.0
    %478 = vmatpush.msra.mxu0 0.0
    %479 = vmatpush.msra.mxu0 0.0
    %480 = vmatpush.msra.mxu0 0.0
    %481 = vmatpush.msra.mxu0 0.0
    %482 = vmatpush.msra.mxu0 0.0
    %483 = vmatpush.msra.mxu0 0.0
    %484 = vmatpush.msra.mxu0 0.0
    %485 = vmatpush.msra.mxu0 %v37
    %486 = vmatpush.msra.mxu0 %v36
    %487 = vmatmul.f32.gmra.mxu0 %v469
    %v488 = vpop.f32.mrf.mxu0
    %v489 = vadd.f32 0.0, %v488
    %490 = vdwg.mxu0
    %v491 = vadd.f32 %v466, %v489
    %v492 = vadd.f32 %v27, %v444
    %v493 = vadd.f32 %v28, %v491
    %v494 = vperm.slane %v29, 4
    %v495 = vadd.f32 %v492, %v494
    %v496 = vadd.f32 %v493, %v494
    %v497 = vsel %vm51, %v495, 0.0
    %498 = vadd.xlane.f32.xlu0 %v497
    %v499 = vpop.xlane.xlu0 %498
    %v500 = vsel %vm51, %v496, 0.0
    %501 = vadd.xlane.f32.xlu0 %v500
    %v502 = vpop.xlane.xlu0 %501
    %v503 = vmul.f32 %v499, %v64
    %v504 = vmul.f32 %v502, %v64
    %v505 = vsub.f32 %v495, %v503
    %v506 = vsub.f32 %v496, %v504
    %v507 = vmul.f32 %v505, %v505
    %v508 = vmul.f32 %v506, %v506
    %v509 = vsel %vm51, %v507, 0.0
    %510 = vadd.xlane.f32.xlu0 %v509
    %v511 = vpop.xlane.xlu0 %510
    %v512 = vsel %vm51, %v508, 0.0
    %513 = vadd.xlane.f32.xlu0 %v512
    %v514 = vpop.xlane.xlu0 %513
    %v515 = vmul.f32 %v511, %v64
    %v516 = vmul.f32 %v514, %v64
    %v517 = vadd.f32 %v515, 1e-05
    %v518 = vadd.f32 %v516, 1e-05
    %v519 = vrsqrt.pop %v517
    %v520 = vmul.f32 %v519, %v517
    %v521 = vmul.f32 %v520, %v519
    %v522 = vmul.f32 0.5, %v521
    %v523 = vsub.f32 1.5, %v522
    %v524 = vmul.f32 %v519, %v523
    %vm525 = vweird.f32 %v517
    %vm526 = vweird.f32 %v519
    %vm527 = vmor %vm525, %vm526
    %v528 = vsel %vm527, %v519, %v524
    %v529 = vrsqrt.pop %v518
    %v530 = vmul.f32 %v529, %v518
    %v531 = vmul.f32 %v530, %v529
    %v532 = vmul.f32 0.5, %v531
    %v533 = vsub.f32 1.5, %v532
    %v534 = vmul.f32 %v529, %v533
    %vm535 = vweird.f32 %v518
    %vm536 = vweird.f32 %v529
    %vm537 = vmor %vm535, %vm536
    %v538 = vsel %vm537, %v529, %v534
    %v539 = vmul.f32 %v505, %v528
    %v540 = vmul.f32 %v506, %v538
    %v541 = vperm.slane %v29, 2
    %v542 = vmul.f32 %v539, %v541
    %v543 = vmul.f32 %v540, %v541
    %v544 = vperm.slane %v29, 3
    %v545 = vadd.f32 %v542, %v544
    %v546 = vadd.f32 %v543, %v544
    %v548 = vperm.slane %v50, 0
    %v551 = vsel %vm51, %v545, 0
    %v554 = vsel %vm51, %v546, 0
    %556 = vmatpush.msra.mxu0 0.0
    %557 = vmatpush.msra.mxu0 0.0
    %558 = vmatpush.msra.mxu0 0.0
    %559 = vmatpush.msra.mxu0 0.0
    %560 = vmatpush.msra.mxu0 0.0
    %561 = vmatpush.msra.mxu0 0.0
    %562 = vmatpush.msra.mxu0 0.0
    %563 = vmatpush.msra.mxu0 0.0
    %564 = vmatpush.msra.mxu0 0.0
    %565 = vmatpush.msra.mxu0 0.0
    %566 = vmatpush.msra.mxu0 0.0
    %567 = vmatpush.msra.mxu0 0.0
    %568 = vmatpush.msra.mxu0 %v41
    %569 = vmatpush.msra.mxu0 %v40
    %570 = vmatpush.msra.mxu0 %v39
    %571 = vmatpush.msra.mxu0 %v38
    %572 = vmatmul.f32.gmra.mxu0 %v551
    %v573 = vpop.f32.mrf.mxu0
    %v574 = vadd.f32 %v548, %v573
    %575 = vmatmul.f32.gmra.mxu0 %v554
    %v576 = vpop.f32.mrf.mxu0
    %v577 = vadd.f32 %v548, %v576
    %578 = vdwg.mxu0
    %v579 = vmul.f32 %v574, 0.5
    %v580 = vmul.f32 %v577, 0.5
    %v581 = vmul.f32 %v574, 0.70710677
    %v582 = vmul.f32 %v577, 0.70710677
    %v583 = vand.u32 2147483647, %v581
    %v584 = vand.u32 2147483647, %v582
    %v585 = vmul.f32 %v583, 0.3275911
    %v586 = vmul.f32 %v584, 0.3275911
    %v587 = vadd.f32 %v585, 1.0
    %v588 = vadd.f32 %v586, 1.0
    %v589 = vrcp.pop %v587
    %v590 = vmul.f32 %v587, %v589
    %v591 = vsub.f32 1.0, %v590
    %v592 = vmul.f32 %v589, %v591
    %v593 = vadd.f32 %v589, %v592
    %vm594 = vweird.f32 %v587
    %vm595 = vweird.f32 %v589
    %vm596 = vmor %vm594, %vm595
    %v597 = vsel %vm596, %v589, %v593
    %v598 = vand.u32 2147483647, %v587
    %vm599 = vcmp.eq.f32.partialorder %v598, 8.507059e+37
    %v600 = vand.u32 %v587, 2147483648
    %v601 = vor.u32 1.1754944e-38, %v600
    %v602 = vsel %vm599, %v601, %v597
    %v603 = vrcp.pop %v588
    %v604 = vmul.f32 %v588, %v603
    %v605 = vsub.f32 1.0, %v604
    %v606 = vmul.f32 %v603, %v605
    %v607 = vadd.f32 %v603, %v606
    %vm608 = vweird.f32 %v588
    %vm609 = vweird.f32 %v603
    %vm610 = vmor %vm608, %vm609
    %v611 = vsel %vm610, %v603, %v607
    %v612 = vand.u32 2147483647, %v588
    %vm613 = vcmp.eq.f32.partialorder %v612, 8.507059e+37
    %v614 = vand.u32 %v588, 2147483648
    %v615 = vor.u32 1.1754944e-38, %v614
    %v616 = vsel %vm613, %v615, %v611
    %v617 = vmul.f32 %v602, 1.0614054
    %v618 = vmul.f32 %v616, 1.0614054
    %v619 = vadd.f32 %v617, -1.4531521
    %v620 = vadd.f32 %v618, -1.4531521
    %v621 = vmul.f32 %v619, %v602
    %v622 = vmul.f32 %v620, %v616
    %v623 = vadd.f32 %v621, 1.4214138
    %v624 = vadd.f32 %v622, 1.4214138
    %v625 = vmul.f32 %v623, %v602
    %v626 = vmul.f32 %v624, %v616
    %v627 = vadd.f32 %v625, -0.28449672
    %v628 = vadd.f32 %v626, -0.28449672
    %v629 = vmul.f32 %v627, %v602
    %v630 = vmul.f32 %v628, %v616
    %v631 = vadd.f32 %v629, 0.2548296
    %v632 = vadd.f32 %v630, 0.2548296
    %v633 = vmul.f32 %v631, %v602
    %v634 = vmul.f32 %v632, %v616
    %v635 = vsub.f32 0.0, %v583
    %v636 = vsub.f32 0.0, %v584
    %v637 = vmul.f32 %v635, %v583
    %v638 = vmul.f32 %v636, %v584
    %v639 = vmul.f32 %v637, 1.442695
    %v640 = vpow.pop %v639
    %v641 = vmul.f32 %v638, 1.442695
    %v642 = vpow.pop %v641
    %v643 = vmul.f32 %v633, %v640
    %v644 = vmul.f32 %v634, %v642
    %v645 = vsub.f32 1.0, %v643
    %v646 = vsub.f32 1.0, %v644
    %vm647 = vcmp.ge.f32.partialorder %v581, 0.0
    %vm648 = vcmp.ge.f32.partialorder %v582, 0.0
    %v649 = vsub.f32 0.0, %v645
    %v650 = vsub.f32 0.0, %v646
    %v651 = vsel %vm647, %v645, %v649
    %v652 = vsel %vm648, %v646, %v650
    %v653 = vadd.f32 %v651, 1.0
    %v654 = vadd.f32 %v652, 1.0
    %v655 = vmul.f32 %v579, %v653
    %v656 = vmul.f32 %v580, %v654
    %v657 = vperm.slane %v29, 5
    %vm658 = vcmask 523264
    %v660 = vsel %vm658, %v655, 0
    %v663 = vsel %vm658, %v656, 0
    %665 = vmatpush.msra.mxu0 0.0
    %666 = vmatpush.msra.mxu0 0.0
    %667 = vmatpush.msra.mxu0 0.0
    %668 = vmatpush.msra.mxu0 0.0
    %669 = vmatpush.msra.mxu0 0.0
    %670 = vmatpush.msra.mxu0 0.0
    %671 = vmatpush.msra.mxu0 0.0
    %672 = vmatpush.msra.mxu0 0.0
    %673 = vmatpush.msra.mxu0 %v49
    %674 = vmatpush.msra.mxu0 %v48
    %675 = vmatpush.msra.mxu0 %v47
    %676 = vmatpush.msra.mxu0 %v46
    %677 = vmatpush.msra.mxu0 %v45
    %678 = vmatpush.msra.mxu0 %v44
    %679 = vmatpush.msra.mxu0 %v43
    %680 = vmatpush.msra.mxu0 %v42
    %681 = vmatmul.f32.gmra.mxu0 %v660
    %v682 = vpop.f32.mrf.mxu0
    %v683 = vadd.f32 %v657, %v682
    %684 = vmatmul.f32.gmra.mxu0 %v663
    %v685 = vpop.f32.mrf.mxu0
    %v686 = vadd.f32 %v657, %v685
    %687 = vdwg.mxu0
    %v688 = vadd.f32 %v495, %v683
    %v689 = vadd.f32 %v496, %v686
    %s690 = scalar_lea.vmem %s5, 8
    %v691 = vld [vmem:[%s690] sm:$0x3f]
    %s692 = scalar_lea.vmem %s1, 32
    %v693 = vld [vmem:[%s692] sm:$0xff]
    %v694 = vld [vmem:[%s692 + $0x8] sm:$0xff]
    %v695 = vld [vmem:[%s692 + $0x10] sm:$0xff]
    %v696 = vld [vmem:[%s692 + $0x18] sm:$0xff]
    %s697 = scalar_lea.vmem %s2, 32
    %v698 = vld [vmem:[%s697] sm:$0xff]
    %v699 = vld [vmem:[%s697 + $0x8] sm:$0xff]
    %v700 = vld [vmem:[%s697 + $0x10] sm:$0xff]
    %v701 = vld [vmem:[%s697 + $0x18] sm:$0xff]
    %s702 = scalar_lea.vmem %s3, 32
    %v703 = vld [vmem:[%s702] sm:$0xff]
    %v704 = vld [vmem:[%s702 + $0x8] sm:$0xff]
    %v705 = vld [vmem:[%s702 + $0x10] sm:$0xff]
    %v706 = vld [vmem:[%s702 + $0x18] sm:$0xff]
    %s707 = scalar_lea.vmem %s4, 64
    %v708 = vld [vmem:[%s707] sm:$0xff]
    %v709 = vld [vmem:[%s707 + $0x8] sm:$0xff]
    %v710 = vld [vmem:[%s707 + $0x10] sm:$0xff]
    %v711 = vld [vmem:[%s707 + $0x18] sm:$0xff]
    %v712 = vld [vmem:[%s707 + $0x20] sm:$0xff]
    %v713 = vld [vmem:[%s707 + $0x28] sm:$0xff]
    %v714 = vld [vmem:[%s707 + $0x30] sm:$0xff]
    %v715 = vld [vmem:[%s707 + $0x38] sm:$0xff]
    %s716 = scalar_lea.vmem %s6, 1
    %v717 = vld [vmem:[%s716] sm:$0x1]
    %v718 = vsel %vm51, %v688, 0.0
    %719 = vadd.xlane.f32.xlu0 %v718
    %v720 = vpop.xlane.xlu0 %719
    %v721 = vsel %vm51, %v689, 0.0
    %722 = vadd.xlane.f32.xlu0 %v721
    %v723 = vpop.xlane.xlu0 %722
    %v724 = vmul.f32 %v720, %v64
    %v725 = vmul.f32 %v723, %v64
    %v726 = vsub.f32 %v688, %v724
    %v727 = vsub.f32 %v689, %v725
    %v728 = vmul.f32 %v726, %v726
    %v729 = vmul.f32 %v727, %v727
    %v730 = vsel %vm51, %v728, 0.0
    %731 = vadd.xlane.f32.xlu0 %v730
    %v732 = vpop.xlane.xlu0 %731
    %v733 = vsel %vm51, %v729, 0.0
    %734 = vadd.xlane.f32.xlu0 %v733
    %v735 = vpop.xlane.xlu0 %734
    %v736 = vmul.f32 %v732, %v64
    %v737 = vmul.f32 %v735, %v64
    %v738 = vadd.f32 %v736, 1e-05
    %v739 = vadd.f32 %v737, 1e-05
    %v740 = vrsqrt.pop %v738
    %v741 = vmul.f32 %v740, %v738
    %v742 = vmul.f32 %v741, %v740
    %v743 = vmul.f32 0.5, %v742
    %v744 = vsub.f32 1.5, %v743
    %v745 = vmul.f32 %v740, %v744
    %vm746 = vweird.f32 %v738
    %vm747 = vweird.f32 %v740
    %vm748 = vmor %vm746, %vm747
    %v749 = vsel %vm748, %v740, %v745
    %v750 = vrsqrt.pop %v739
    %v751 = vmul.f32 %v750, %v739
    %v752 = vmul.f32 %v751, %v750
    %v753 = vmul.f32 0.5, %v752
    %v754 = vsub.f32 1.5, %v753
    %v755 = vmul.f32 %v750, %v754
    %vm756 = vweird.f32 %v739
    %vm757 = vweird.f32 %v750
    %vm758 = vmor %vm756, %vm757
    %v759 = vsel %vm758, %v750, %v755
    %v760 = vmul.f32 %v726, %v749
    %v761 = vmul.f32 %v727, %v759
    %v762 = vperm.slane %v691, 0
    %v763 = vmul.f32 %v760, %v762
    %v764 = vmul.f32 %v761, %v762
    %v765 = vperm.slane %v691, 1
    %v766 = vadd.f32 %v763, %v765
    %v767 = vadd.f32 %v764, %v765
    %v769 = vsel %vm51, %v766, 0
    %v772 = vsel %vm51, %v767, 0
    %774 = vmatpush.msra.mxu0 0.0
    %775 = vmatpush.msra.mxu0 0.0
    %776 = vmatpush.msra.mxu0 0.0
    %777 = vmatpush.msra.mxu0 0.0
    %778 = vmatpush.msra.mxu0 0.0
    %779 = vmatpush.msra.mxu0 0.0
    %780 = vmatpush.msra.mxu0 0.0
    %781 = vmatpush.msra.mxu0 0.0
    %782 = vmatpush.msra.mxu0 0.0
    %783 = vmatpush.msra.mxu0 0.0
    %784 = vmatpush.msra.mxu0 0.0
    %785 = vmatpush.msra.mxu0 0.0
    %786 = vmatpush.msra.mxu0 %v696
    %787 = vmatpush.msra.mxu0 %v695
    %788 = vmatpush.msra.mxu0 %v694
    %789 = vmatpush.msra.mxu0 %v693
    %790 = vmatmul.f32.gmra.mxu0 %v769
    %v791 = vpop.f32.mrf.mxu0
    %v792 = vadd.f32 0.0, %v791
    %793 = vmatmul.f32.gmra.mxu0 %v772
    %v794 = vpop.f32.mrf.mxu0
    %v795 = vadd.f32 0.0, %v794
    %796 = vdwg.mxu0
    %798 = vrot.lane.b32.xlu0 %v792, 112
    %v799 = vpop.permute.xlu0 %798
    %801 = vrot.lane.b32.xlu0 %v795, 112
    %v802 = vpop.permute.xlu0 %801
    %803 = vrot.lane.b32.xlu0 %v792, 96
    %v804 = vpop.permute.xlu0 %803
    %v805 = vsel %vm146, %v792, 0
    %v807 = vsel %vm146, %v804, 0
    %809 = vmatpush.xpose.msra.mxu0 0.0
    %810 = vmatpush.xpose.msra.mxu0 0.0
    %811 = vmatpush.xpose.msra.mxu0 0.0
    %812 = vmatpush.xpose.msra.mxu0 0.0
    %813 = vmatpush.xpose.msra.mxu0 0.0
    %814 = vmatpush.xpose.msra.mxu0 0.0
    %815 = vmatpush.xpose.msra.mxu0 0.0
    %816 = vmatpush.xpose.msra.mxu0 0.0
    %817 = vmatpush.xpose.msra.mxu0 0.0
    %818 = vmatpush.xpose.msra.mxu0 0.0
    %819 = vmatpush.xpose.msra.mxu0 0.0
    %820 = vmatpush.xpose.msra.mxu0 0.0
    %821 = vmatpush.xpose.msra.mxu0 0.0
    %822 = vmatpush.xpose.msra.mxu0 0.0
    %823 = vmatpush.xpose.msra.mxu0 0.0
    %824 = vmatpush.xpose.msra.mxu0 %v807
    %825 = vmatmul.f32.gmra.mxu0 %v805
    %v826 = vpop.f32.mrf.mxu0
    %v827 = vadd.f32 0.0, %v826
    %828 = vdwg.mxu0
    %829 = vrot.lane.b32.xlu0 %v799, 96
    %v830 = vpop.permute.xlu0 %829
    %v831 = vsel %vm146, %v799, 0
    %v833 = vsel %vm146, %v830, 0
    %835 = vmatpush.xpose.msra.mxu0 0.0
    %836 = vmatpush.xpose.msra.mxu0 0.0
    %837 = vmatpush.xpose.msra.mxu0 0.0
    %838 = vmatpush.xpose.msra.mxu0 0.0
    %839 = vmatpush.xpose.msra.mxu0 0.0
    %840 = vmatpush.xpose.msra.mxu0 0.0
    %841 = vmatpush.xpose.msra.mxu0 0.0
    %842 = vmatpush.xpose.msra.mxu0 0.0
    %843 = vmatpush.xpose.msra.mxu0 0.0
    %844 = vmatpush.xpose.msra.mxu0 0.0
    %845 = vmatpush.xpose.msra.mxu0 0.0
    %846 = vmatpush.xpose.msra.mxu0 0.0
    %847 = vmatpush.xpose.msra.mxu0 0.0
    %848 = vmatpush.xpose.msra.mxu0 0.0
    %849 = vmatpush.xpose.msra.mxu0 0.0
    %850 = vmatpush.xpose.msra.mxu0 %v833
    %851 = vmatmul.f32.gmra.mxu0 %v831
    %v852 = vpop.f32.mrf.mxu0
    %v853 = vadd.f32 0.0, %v852
    %854 = vdwg.mxu0
    %855 = vrot.lane.b32.xlu0 %v795, 96
    %v856 = vpop.permute.xlu0 %855
    %v857 = vsel %vm146, %v795, 0
    %v859 = vsel %vm146, %v856, 0
    %861 = vmatpush.xpose.msra.mxu0 0.0
    %862 = vmatpush.xpose.msra.mxu0 0.0
    %863 = vmatpush.xpose.msra.mxu0 0.0
    %864 = vmatpush.xpose.msra.mxu0 0.0
    %865 = vmatpush.xpose.msra.mxu0 0.0
    %866 = vmatpush.xpose.msra.mxu0 0.0
    %867 = vmatpush.xpose.msra.mxu0 0.0
    %868 = vmatpush.xpose.msra.mxu0 0.0
    %869 = vmatpush.xpose.msra.mxu0 0.0
    %870 = vmatpush.xpose.msra.mxu0 0.0
    %871 = vmatpush.xpose.msra.mxu0 0.0
    %872 = vmatpush.xpose.msra.mxu0 0.0
    %873 = vmatpush.xpose.msra.mxu0 0.0
    %874 = vmatpush.xpose.msra.mxu0 0.0
    %875 = vmatpush.xpose.msra.mxu0 0.0
    %876 = vmatpush.xpose.msra.mxu0 %v859
    %877 = vmatmul.f32.gmra.mxu0 %v857
    %v878 = vpop.f32.mrf.mxu0
    %v879 = vadd.f32 0.0, %v878
    %880 = vdwg.mxu0
    %881 = vrot.lane.b32.xlu0 %v802, 96
    %v882 = vpop.permute.xlu0 %881
    %v883 = vsel %vm146, %v802, 0
    %v885 = vsel %vm146, %v882, 0
    %887 = vmatpush.xpose.msra.mxu0 0.0
    %888 = vmatpush.xpose.msra.mxu0 0.0
    %889 = vmatpush.xpose.msra.mxu0 0.0
    %890 = vmatpush.xpose.msra.mxu0 0.0
    %891 = vmatpush.xpose.msra.mxu0 0.0
    %892 = vmatpush.xpose.msra.mxu0 0.0
    %893 = vmatpush.xpose.msra.mxu0 0.0
    %894 = vmatpush.xpose.msra.mxu0 0.0
    %895 = vmatpush.xpose.msra.mxu0 0.0
    %896 = vmatpush.xpose.msra.mxu0 0.0
    %897 = vmatpush.xpose.msra.mxu0 0.0
    %898 = vmatpush.xpose.msra.mxu0 0.0
    %899 = vmatpush.xpose.msra.mxu0 0.0
    %900 = vmatpush.xpose.msra.mxu0 0.0
    %901 = vmatpush.xpose.msra.mxu0 0.0
    %902 = vmatpush.xpose.msra.mxu0 %v885
    %903 = vmatmul.f32.gmra.mxu0 %v883
    %v904 = vpop.f32.mrf.mxu0
    %v905 = vadd.f32 0.0, %v904
    %906 = vdwg.mxu0
    %v907 = vsel %vm249, %v827, -inf
    %908 = vmax.xlane.f32.xlu0 %v907
    %v909 = vpop.xlane.xlu0 %908
    %v910 = vsel %vm249, %v853, -inf
    %911 = vmax.xlane.f32.xlu0 %v910
    %v912 = vpop.xlane.xlu0 %911
    %v913 = vsel %vm249, %v879, -inf
    %914 = vmax.xlane.f32.xlu0 %v913
    %v915 = vpop.xlane.xlu0 %914
    %v916 = vsel %vm249, %v905, -inf
    %917 = vmax.xlane.f32.xlu0 %v916
    %v918 = vpop.xlane.xlu0 %917
    %v919 = vsub.f32 %v827, %v909
    %v920 = vsub.f32 %v853, %v912
    %v921 = vsub.f32 %v879, %v915
    %v922 = vsub.f32 %v905, %v918
    %v923 = vmul.f32 %v919, 1.442695
    %v924 = vpow.pop %v923
    %v925 = vmul.f32 %v920, 1.442695
    %v926 = vpow.pop %v925
    %v927 = vmul.f32 %v921, 1.442695
    %v928 = vpow.pop %v927
    %v929 = vmul.f32 %v922, 1.442695
    %v930 = vpow.pop %v929
    %v931 = vsel %vm249, %v924, 0.0
    %932 = vadd.xlane.f32.xlu0 %v931
    %v933 = vpop.xlane.xlu0 %932
    %v934 = vsel %vm249, %v926, 0.0
    %935 = vadd.xlane.f32.xlu0 %v934
    %v936 = vpop.xlane.xlu0 %935
    %v937 = vsel %vm249, %v928, 0.0
    %938 = vadd.xlane.f32.xlu0 %v937
    %v939 = vpop.xlane.xlu0 %938
    %v940 = vsel %vm249, %v930, 0.0
    %941 = vadd.xlane.f32.xlu0 %v940
    %v942 = vpop.xlane.xlu0 %941
    %v943 = vrcp.pop %v933
    %v944 = vrcp.pop %v936
    %v945 = vrcp.pop %v939
    %v946 = vrcp.pop %v942
    %v947 = vmul.f32 %v924, %v943
    %v948 = vmul.f32 %v926, %v944
    %v949 = vmul.f32 %v928, %v945
    %v950 = vmul.f32 %v930, %v946
    %951 = vrot.lane.b32.xlu0 %v792, 64
    %v952 = vpop.permute.xlu0 %951
    %v955 = vsel %vm249, %v947, 0
    %957 = vmatpush.msra.mxu0 0.0
    %958 = vmatpush.msra.mxu0 0.0
    %959 = vmatpush.msra.mxu0 0.0
    %960 = vmatpush.msra.mxu0 0.0
    %961 = vmatpush.msra.mxu0 0.0
    %962 = vmatpush.msra.mxu0 0.0
    %963 = vmatpush.msra.mxu0 0.0
    %964 = vmatpush.msra.mxu0 0.0
    %965 = vmatpush.msra.mxu0 0.0
    %966 = vmatpush.msra.mxu0 0.0
    %967 = vmatpush.msra.mxu0 0.0
    %968 = vmatpush.msra.mxu0 0.0
    %969 = vmatpush.msra.mxu0 0.0
    %970 = vmatpush.msra.mxu0 0.0
    %971 = vmatpush.msra.mxu0 0.0
    %972 = vmatpush.msra.mxu0 %v952
    %973 = vmatmul.f32.gmra.mxu0 %v955
    %v974 = vpop.f32.mrf.mxu0
    %v975 = vadd.f32 0.0, %v974
    %976 = vdwg.mxu0
    %977 = vrot.lane.b32.xlu0 %v799, 64
    %v978 = vpop.permute.xlu0 %977
    %v981 = vsel %vm249, %v948, 0
    %983 = vmatpush.msra.mxu0 0.0
    %984 = vmatpush.msra.mxu0 0.0
    %985 = vmatpush.msra.mxu0 0.0
    %986 = vmatpush.msra.mxu0 0.0
    %987 = vmatpush.msra.mxu0 0.0
    %988 = vmatpush.msra.mxu0 0.0
    %989 = vmatpush.msra.mxu0 0.0
    %990 = vmatpush.msra.mxu0 0.0
    %991 = vmatpush.msra.mxu0 0.0
    %992 = vmatpush.msra.mxu0 0.0
    %993 = vmatpush.msra.mxu0 0.0
    %994 = vmatpush.msra.mxu0 0.0
    %995 = vmatpush.msra.mxu0 0.0
    %996 = vmatpush.msra.mxu0 0.0
    %997 = vmatpush.msra.mxu0 0.0
    %998 = vmatpush.msra.mxu0 %v978
    %999 = vmatmul.f32.gmra.mxu0 %v981
    %v1000 = vpop.f32.mrf.mxu0
    %v1001 = vadd.f32 0.0, %v1000
    %1002 = vdwg.mxu0
    %1003 = vrot.lane.b32.xlu0 %v795, 64
    %v1004 = vpop.permute.xlu0 %1003
    %v1007 = vsel %vm249, %v949, 0
    %1009 = vmatpush.msra.mxu0 0.0
    %1010 = vmatpush.msra.mxu0 0.0
    %1011 = vmatpush.msra.mxu0 0.0
    %1012 = vmatpush.msra.mxu0 0.0
    %1013 = vmatpush.msra.mxu0 0.0
    %1014 = vmatpush.msra.mxu0 0.0
    %1015 = vmatpush.msra.mxu0 0.0
    %1016 = vmatpush.msra.mxu0 0.0
    %1017 = vmatpush.msra.mxu0 0.0
    %1018 = vmatpush.msra.mxu0 0.0
    %1019 = vmatpush.msra.mxu0 0.0
    %1020 = vmatpush.msra.mxu0 0.0
    %1021 = vmatpush.msra.mxu0 0.0
    %1022 = vmatpush.msra.mxu0 0.0
    %1023 = vmatpush.msra.mxu0 0.0
    %1024 = vmatpush.msra.mxu0 %v1004
    %1025 = vmatmul.f32.gmra.mxu0 %v1007
    %v1026 = vpop.f32.mrf.mxu0
    %v1027 = vadd.f32 0.0, %v1026
    %1028 = vdwg.mxu0
    %1029 = vrot.lane.b32.xlu0 %v802, 64
    %v1030 = vpop.permute.xlu0 %1029
    %v1033 = vsel %vm249, %v950, 0
    %1035 = vmatpush.msra.mxu0 0.0
    %1036 = vmatpush.msra.mxu0 0.0
    %1037 = vmatpush.msra.mxu0 0.0
    %1038 = vmatpush.msra.mxu0 0.0
    %1039 = vmatpush.msra.mxu0 0.0
    %1040 = vmatpush.msra.mxu0 0.0
    %1041 = vmatpush.msra.mxu0 0.0
    %1042 = vmatpush.msra.mxu0 0.0
    %1043 = vmatpush.msra.mxu0 0.0
    %1044 = vmatpush.msra.mxu0 0.0
    %1045 = vmatpush.msra.mxu0 0.0
    %1046 = vmatpush.msra.mxu0 0.0
    %1047 = vmatpush.msra.mxu0 0.0
    %1048 = vmatpush.msra.mxu0 0.0
    %1049 = vmatpush.msra.mxu0 0.0
    %1050 = vmatpush.msra.mxu0 %v1030
    %1051 = vmatmul.f32.gmra.mxu0 %v1033
    %v1052 = vpop.f32.mrf.mxu0
    %v1053 = vadd.f32 0.0, %v1052
    %1054 = vdwg.mxu0
    %v1056 = vsel %vm146, %v975, 0
    %1058 = vmatpush.msra.mxu0 0.0
    %1059 = vmatpush.msra.mxu0 0.0
    %1060 = vmatpush.msra.mxu0 0.0
    %1061 = vmatpush.msra.mxu0 0.0
    %1062 = vmatpush.msra.mxu0 0.0
    %1063 = vmatpush.msra.mxu0 0.0
    %1064 = vmatpush.msra.mxu0 0.0
    %1065 = vmatpush.msra.mxu0 0.0
    %1066 = vmatpush.msra.mxu0 0.0
    %1067 = vmatpush.msra.mxu0 0.0
    %1068 = vmatpush.msra.mxu0 0.0
    %1069 = vmatpush.msra.mxu0 0.0
    %1070 = vmatpush.msra.mxu0 0.0
    %1071 = vmatpush.msra.mxu0 0.0
    %1072 = vmatpush.msra.mxu0 %v699
    %1073 = vmatpush.msra.mxu0 %v698
    %1074 = vmatmul.f32.gmra.mxu0 %v1056
    %v1075 = vpop.f32.mrf.mxu0
    %v1076 = vadd.f32 0.0, %v1075
    %1077 = vdwg.mxu0
    %v1079 = vsel %vm146, %v1001, 0
    %1081 = vmatpush.msra.mxu0 0.0
    %1082 = vmatpush.msra.mxu0 0.0
    %1083 = vmatpush.msra.mxu0 0.0
    %1084 = vmatpush.msra.mxu0 0.0
    %1085 = vmatpush.msra.mxu0 0.0
    %1086 = vmatpush.msra.mxu0 0.0
    %1087 = vmatpush.msra.mxu0 0.0
    %1088 = vmatpush.msra.mxu0 0.0
    %1089 = vmatpush.msra.mxu0 0.0
    %1090 = vmatpush.msra.mxu0 0.0
    %1091 = vmatpush.msra.mxu0 0.0
    %1092 = vmatpush.msra.mxu0 0.0
    %1093 = vmatpush.msra.mxu0 0.0
    %1094 = vmatpush.msra.mxu0 0.0
    %1095 = vmatpush.msra.mxu0 %v701
    %1096 = vmatpush.msra.mxu0 %v700
    %1097 = vmatmul.f32.gmra.mxu0 %v1079
    %v1098 = vpop.f32.mrf.mxu0
    %v1099 = vadd.f32 0.0, %v1098
    %1100 = vdwg.mxu0
    %v1101 = vadd.f32 %v1076, %v1099
    %v1103 = vsel %vm146, %v1027, 0
    %1105 = vmatpush.msra.mxu0 0.0
    %1106 = vmatpush.msra.mxu0 0.0
    %1107 = vmatpush.msra.mxu0 0.0
    %1108 = vmatpush.msra.mxu0 0.0
    %1109 = vmatpush.msra.mxu0 0.0
    %1110 = vmatpush.msra.mxu0 0.0
    %1111 = vmatpush.msra.mxu0 0.0
    %1112 = vmatpush.msra.mxu0 0.0
    %1113 = vmatpush.msra.mxu0 0.0
    %1114 = vmatpush.msra.mxu0 0.0
    %1115 = vmatpush.msra.mxu0 0.0
    %1116 = vmatpush.msra.mxu0 0.0
    %1117 = vmatpush.msra.mxu0 0.0
    %1118 = vmatpush.msra.mxu0 0.0
    %1119 = vmatpush.msra.mxu0 %v699
    %1120 = vmatpush.msra.mxu0 %v698
    %1121 = vmatmul.f32.gmra.mxu0 %v1103
    %v1122 = vpop.f32.mrf.mxu0
    %v1123 = vadd.f32 0.0, %v1122
    %1124 = vdwg.mxu0
    %v1126 = vsel %vm146, %v1053, 0
    %1128 = vmatpush.msra.mxu0 0.0
    %1129 = vmatpush.msra.mxu0 0.0
    %1130 = vmatpush.msra.mxu0 0.0
    %1131 = vmatpush.msra.mxu0 0.0
    %1132 = vmatpush.msra.mxu0 0.0
    %1133 = vmatpush.msra.mxu0 0.0
    %1134 = vmatpush.msra.mxu0 0.0
    %1135 = vmatpush.msra.mxu0 0.0
    %1136 = vmatpush.msra.mxu0 0.0
    %1137 = vmatpush.msra.mxu0 0.0
    %1138 = vmatpush.msra.mxu0 0.0
    %1139 = vmatpush.msra.mxu0 0.0
    %1140 = vmatpush.msra.mxu0 0.0
    %1141 = vmatpush.msra.mxu0 0.0
    %1142 = vmatpush.msra.mxu0 %v701
    %1143 = vmatpush.msra.mxu0 %v700
    %1144 = vmatmul.f32.gmra.mxu0 %v1126
    %v1145 = vpop.f32.mrf.mxu0
    %v1146 = vadd.f32 0.0, %v1145
    %1147 = vdwg.mxu0
    %v1148 = vadd.f32 %v1123, %v1146
    %v1149 = vadd.f32 %v688, %v1101
    %v1150 = vadd.f32 %v689, %v1148
    %v1151 = vperm.slane %v691, 4
    %v1152 = vadd.f32 %v1149, %v1151
    %v1153 = vadd.f32 %v1150, %v1151
    %v1154 = vsel %vm51, %v1152, 0.0
    %1155 = vadd.xlane.f32.xlu0 %v1154
    %v1156 = vpop.xlane.xlu0 %1155
    %v1157 = vsel %vm51, %v1153, 0.0
    %1158 = vadd.xlane.f32.xlu0 %v1157
    %v1159 = vpop.xlane.xlu0 %1158
    %v1160 = vmul.f32 %v1156, %v64
    %v1161 = vmul.f32 %v1159, %v64
    %v1162 = vsub.f32 %v1152, %v1160
    %v1163 = vsub.f32 %v1153, %v1161
    %v1164 = vmul.f32 %v1162, %v1162
    %v1165 = vmul.f32 %v1163, %v1163
    %v1166 = vsel %vm51, %v1164, 0.0
    %1167 = vadd.xlane.f32.xlu0 %v1166
    %v1168 = vpop.xlane.xlu0 %1167
    %v1169 = vsel %vm51, %v1165, 0.0
    %1170 = vadd.xlane.f32.xlu0 %v1169
    %v1171 = vpop.xlane.xlu0 %1170
    %v1172 = vmul.f32 %v1168, %v64
    %v1173 = vmul.f32 %v1171, %v64
    %v1174 = vadd.f32 %v1172, 1e-05
    %v1175 = vadd.f32 %v1173, 1e-05
    %v1176 = vrsqrt.pop %v1174
    %v1177 = vmul.f32 %v1176, %v1174
    %v1178 = vmul.f32 %v1177, %v1176
    %v1179 = vmul.f32 0.5, %v1178
    %v1180 = vsub.f32 1.5, %v1179
    %v1181 = vmul.f32 %v1176, %v1180
    %vm1182 = vweird.f32 %v1174
    %vm1183 = vweird.f32 %v1176
    %vm1184 = vmor %vm1182, %vm1183
    %v1185 = vsel %vm1184, %v1176, %v1181
    %v1186 = vrsqrt.pop %v1175
    %v1187 = vmul.f32 %v1186, %v1175
    %v1188 = vmul.f32 %v1187, %v1186
    %v1189 = vmul.f32 0.5, %v1188
    %v1190 = vsub.f32 1.5, %v1189
    %v1191 = vmul.f32 %v1186, %v1190
    %vm1192 = vweird.f32 %v1175
    %vm1193 = vweird.f32 %v1186
    %vm1194 = vmor %vm1192, %vm1193
    %v1195 = vsel %vm1194, %v1186, %v1191
    %v1196 = vmul.f32 %v1162, %v1185
    %v1197 = vmul.f32 %v1163, %v1195
    %v1198 = vperm.slane %v691, 2
    %v1199 = vmul.f32 %v1196, %v1198
    %v1200 = vmul.f32 %v1197, %v1198
    %v1201 = vperm.slane %v691, 3
    %v1202 = vadd.f32 %v1199, %v1201
    %v1203 = vadd.f32 %v1200, %v1201
    %v1205 = vperm.slane %v717, 0
    %v1208 = vsel %vm51, %v1202, 0
    %v1211 = vsel %vm51, %v1203, 0
    %1213 = vmatpush.msra.mxu0 0.0
    %1214 = vmatpush.msra.mxu0 0.0
    %1215 = vmatpush.msra.mxu0 0.0
    %1216 = vmatpush.msra.mxu0 0.0
    %1217 = vmatpush.msra.mxu0 0.0
    %1218 = vmatpush.msra.mxu0 0.0
    %1219 = vmatpush.msra.mxu0 0.0
    %1220 = vmatpush.msra.mxu0 0.0
    %1221 = vmatpush.msra.mxu0 0.0
    %1222 = vmatpush.msra.mxu0 0.0
    %1223 = vmatpush.msra.mxu0 0.0
    %1224 = vmatpush.msra.mxu0 0.0
    %1225 = vmatpush.msra.mxu0 %v706
    %1226 = vmatpush.msra.mxu0 %v705
    %1227 = vmatpush.msra.mxu0 %v704
    %1228 = vmatpush.msra.mxu0 %v703
    %1229 = vmatmul.f32.gmra.mxu0 %v1208
    %v1230 = vpop.f32.mrf.mxu0
    %v1231 = vadd.f32 %v1205, %v1230
    %1232 = vmatmul.f32.gmra.mxu0 %v1211
    %v1233 = vpop.f32.mrf.mxu0
    %v1234 = vadd.f32 %v1205, %v1233
    %1235 = vdwg.mxu0
    %v1236 = vmul.f32 %v1231, 0.5
    %v1237 = vmul.f32 %v1234, 0.5
    %v1238 = vmul.f32 %v1231, 0.70710677
    %v1239 = vmul.f32 %v1234, 0.70710677
    %v1240 = vand.u32 2147483647, %v1238
    %v1241 = vand.u32 2147483647, %v1239
    %v1242 = vmul.f32 %v1240, 0.3275911
    %v1243 = vmul.f32 %v1241, 0.3275911
    %v1244 = vadd.f32 %v1242, 1.0
    %v1245 = vadd.f32 %v1243, 1.0
    %v1246 = vrcp.pop %v1244
    %v1247 = vmul.f32 %v1244, %v1246
    %v1248 = vsub.f32 1.0, %v1247
    %v1249 = vmul.f32 %v1246, %v1248
    %v1250 = vadd.f32 %v1246, %v1249
    %vm1251 = vweird.f32 %v1244
    %vm1252 = vweird.f32 %v1246
    %vm1253 = vmor %vm1251, %vm1252
    %v1254 = vsel %vm1253, %v1246, %v1250
    %v1255 = vand.u32 2147483647, %v1244
    %vm1256 = vcmp.eq.f32.partialorder %v1255, 8.507059e+37
    %v1257 = vand.u32 %v1244, 2147483648
    %v1258 = vor.u32 1.1754944e-38, %v1257
    %v1259 = vsel %vm1256, %v1258, %v1254
    %v1260 = vrcp.pop %v1245
    %v1261 = vmul.f32 %v1245, %v1260
    %v1262 = vsub.f32 1.0, %v1261
    %v1263 = vmul.f32 %v1260, %v1262
    %v1264 = vadd.f32 %v1260, %v1263
    %vm1265 = vweird.f32 %v1245
    %vm1266 = vweird.f32 %v1260
    %vm1267 = vmor %vm1265, %vm1266
    %v1268 = vsel %vm1267, %v1260, %v1264
    %v1269 = vand.u32 2147483647, %v1245
    %vm1270 = vcmp.eq.f32.partialorder %v1269, 8.507059e+37
    %v1271 = vand.u32 %v1245, 2147483648
    %v1272 = vor.u32 1.1754944e-38, %v1271
    %v1273 = vsel %vm1270, %v1272, %v1268
    %v1274 = vmul.f32 %v1259, 1.0614054
    %v1275 = vmul.f32 %v1273, 1.0614054
    %v1276 = vadd.f32 %v1274, -1.4531521
    %v1277 = vadd.f32 %v1275, -1.4531521
    %v1278 = vmul.f32 %v1276, %v1259
    %v1279 = vmul.f32 %v1277, %v1273
    %v1280 = vadd.f32 %v1278, 1.4214138
    %v1281 = vadd.f32 %v1279, 1.4214138
    %v1282 = vmul.f32 %v1280, %v1259
    %v1283 = vmul.f32 %v1281, %v1273
    %v1284 = vadd.f32 %v1282, -0.28449672
    %v1285 = vadd.f32 %v1283, -0.28449672
    %v1286 = vmul.f32 %v1284, %v1259
    %v1287 = vmul.f32 %v1285, %v1273
    %v1288 = vadd.f32 %v1286, 0.2548296
    %v1289 = vadd.f32 %v1287, 0.2548296
    %v1290 = vmul.f32 %v1288, %v1259
    %v1291 = vmul.f32 %v1289, %v1273
    %v1292 = vsub.f32 0.0, %v1240
    %v1293 = vsub.f32 0.0, %v1241
    %v1294 = vmul.f32 %v1292, %v1240
    %v1295 = vmul.f32 %v1293, %v1241
    %v1296 = vmul.f32 %v1294, 1.442695
    %v1297 = vpow.pop %v1296
    %v1298 = vmul.f32 %v1295, 1.442695
    %v1299 = vpow.pop %v1298
    %v1300 = vmul.f32 %v1290, %v1297
    %v1301 = vmul.f32 %v1291, %v1299
    %v1302 = vsub.f32 1.0, %v1300
    %v1303 = vsub.f32 1.0, %v1301
    %vm1304 = vcmp.ge.f32.partialorder %v1238, 0.0
    %vm1305 = vcmp.ge.f32.partialorder %v1239, 0.0
    %v1306 = vsub.f32 0.0, %v1302
    %v1307 = vsub.f32 0.0, %v1303
    %v1308 = vsel %vm1304, %v1302, %v1306
    %v1309 = vsel %vm1305, %v1303, %v1307
    %v1310 = vadd.f32 %v1308, 1.0
    %v1311 = vadd.f32 %v1309, 1.0
    %v1312 = vmul.f32 %v1236, %v1310
    %v1313 = vmul.f32 %v1237, %v1311
    %v1314 = vperm.slane %v691, 5
    %v1316 = vsel %vm658, %v1312, 0
    %v1319 = vsel %vm658, %v1313, 0
    %1321 = vmatpush.msra.mxu0 0.0
    %1322 = vmatpush.msra.mxu0 0.0
    %1323 = vmatpush.msra.mxu0 0.0
    %1324 = vmatpush.msra.mxu0 0.0
    %1325 = vmatpush.msra.mxu0 0.0
    %1326 = vmatpush.msra.mxu0 0.0
    %1327 = vmatpush.msra.mxu0 0.0
    %1328 = vmatpush.msra.mxu0 0.0
    %1329 = vmatpush.msra.mxu0 %v715
    %1330 = vmatpush.msra.mxu0 %v714
    %1331 = vmatpush.msra.mxu0 %v713
    %1332 = vmatpush.msra.mxu0 %v712
    %1333 = vmatpush.msra.mxu0 %v711
    %1334 = vmatpush.msra.mxu0 %v710
    %1335 = vmatpush.msra.mxu0 %v709
    %1336 = vmatpush.msra.mxu0 %v708
    %1337 = vmatmul.f32.gmra.mxu0 %v1316
    %v1338 = vpop.f32.mrf.mxu0
    %v1339 = vadd.f32 %v1314, %v1338
    %1340 = vmatmul.f32.gmra.mxu0 %v1319
    %v1341 = vpop.f32.mrf.mxu0
    %v1342 = vadd.f32 %v1314, %v1341
    %1343 = vdwg.mxu0
    %v1344 = vadd.f32 %v1152, %v1339
    %v1345 = vadd.f32 %v1153, %v1342
    %1346 = vst.msk [vmem:[#allocation2] sm:$0xff] %vm51, %v1344
    %1347 = vst.msk [vmem:[#allocation2 + $0x8] sm:$0xff] %vm51, %v1345
    // Predicated region
    $region30: #{tpu_custom_call.1} parent=1 // pred_check
      _
    $region31: #{tpu_custom_call.1} parent=1 // pred_check_branch
      %1349 = sbr.rel (0) target = $region33
    $region32: #{tpu_custom_call.1} parent=1 // pred_region
      %1351 = vsyncadd [#allocation3], 0
      %s1352 = sshll.u32 [#allocation2], 4
      %s1353 = int_to_ptr.vmem [resolvable:$true] %s1352
      %s1354 = sshll.u32 %s7, 4
      %s1355 = int_to_ptr.hbm [resolvable:$true] %s1354
      %1360 = dma.vmem_to_hbm [thread:$0]  %s1353, 256, %s1355, [#allocation3], 128, 128, 8
    $region33: #{tpu_custom_call.1} parent=1 // pred_fallthru
      _
    // Predicated region
    $region34: #{tpu_custom_call.1} parent=1 // pred_check
      _
    $region35: #{tpu_custom_call.1} parent=1 // pred_check_branch
      %1362 = sbr.rel (0) target = $region37
    $region36: #{tpu_custom_call.1} parent=1 // pred_region
      %1364 = dma.done [#allocation3], 256
    $region37: #{tpu_custom_call.1} parent=1 // pred_fallthru
      _
    %1365 = vsyncpa [#allocation3], 1

</llo_original>
